<compile_context>
chip_gen: v7x
topology: tpu7x:2x2x1
jax: 0.10.0
libtpu: 0.0.40
codegen_flags: <defaults>
</compile_context>

<pallas_src>
import math
import re
import functools

import jax
import jax.numpy as jnp
from jax.experimental import pallas as pl
from jax.experimental.pallas import tpu as pltpu


_NEG_BIG = -1e30  # finite mask / running-max init: avoids -inf arithmetic.


def _layernorm(v, g, b, eps=1e-5):
    mu = jnp.mean(v, axis=-1, keepdims=True)
    var = jnp.mean((v - mu) ** 2, axis=-1, keepdims=True)
    return (v - mu) * jax.lax.rsqrt(var + eps) * g + b


def _new_gelu(x):
    # exact "NewGELU" (tanh approximation used by GPT-2 / OpenAI)
    return 0.5 * x * (1.0 + jnp.tanh(math.sqrt(2.0 / math.pi) * (x + 0.044715 * x ** 3)))


def block_kernel(x_ref,
                 ln1_g_ref, ln1_b_ref,
                 w_attn_ref, b_attn_ref,
                 w_aproj_ref, b_aproj_ref,
                 ln2_g_ref, ln2_b_ref,
                 w_fc_ref, b_fc_ref,
                 w_mproj_ref, b_mproj_ref,
                 o_ref,
                 q_scr, k_scr, v_scr,
                 *, n_head: int, q_tile: int, gelu_bf16: bool):
    T, C = x_ref.shape                    # full (T, C) slab for this batch elem
    hd = C // n_head
    k_tile = q_tile                       # key tiles match query tiles
    bf16 = jnp.bfloat16
    f32 = jnp.float32

    qi = pl.program_id(1)                 # query-tile index (innermost axis)
    q0 = pl.multiple_of(qi * q_tile, q_tile)

    # ---- LN1 + QKV projection + head split for the FULL sequence, ONCE per
    # batch element.  Results live in head-major bf16 VMEM scratch and are
    # reused (sliced only) by every query tile of this batch element.
    @pl.when(qi == 0)
    def _():
        h = _layernorm(x_ref[...], ln1_g_ref[...], ln1_b_ref[...])
        qkv = (jnp.dot(h.astype(bf16), w_attn_ref[...],
                       preferred_element_type=f32)
               + b_attn_ref[...])                          # (T, 3C) f32
        # One-time head split (the only place lane-boundary slices happen).
        for hh in range(n_head):
            q_scr[hh] = qkv[:, 0 * C + hh * hd: 0 * C + (hh + 1) * hd].astype(bf16)
            k_scr[hh] = qkv[:, 1 * C + hh * hd: 1 * C + (hh + 1) * hd].astype(bf16)
            v_scr[hh] = qkv[:, 2 * C + hh * hd: 2 * C + (hh + 1) * hd].astype(bf16)

    # Q for this query tile (already pre-scaled by 1/sqrt(hd) in the wrapper).
    q_h = q_scr[:, pl.ds(q0, q_tile), :]                   # (nh, TQ, hd) bf16

    # ---- Flash-style online softmax over key tiles, skipping tiles that are
    # entirely above the causal diagonal (ki > qi).
    row = q0 + jax.lax.broadcasted_iota(jnp.int32, (q_tile, k_tile), 0)
    col = jax.lax.broadcasted_iota(jnp.int32, (q_tile, k_tile), 1)

    m0 = jnp.full((n_head, q_tile, 1), _NEG_BIG, f32)
    l0 = jnp.zeros((n_head, q_tile, 1), f32)
    a0 = jnp.zeros((n_head, q_tile, hd), f32)

    def kv_step(ki, carry):
        m_prev, l_prev, acc_prev = carry
        k0 = pl.multiple_of(ki * k_tile, k_tile)
        k_t = k_scr[:, pl.ds(k0, k_tile), :]               # (nh, TK, hd) bf16
        v_t = v_scr[:, pl.ds(k0, k_tile), :]               # (nh, TK, hd) bf16

        s = jnp.einsum('hqd,hkd->hqk', q_h, k_t,
                       preferred_element_type=f32)         # (nh, TQ, TK)
        # Causal mask (only the diagonal tile has masked entries; earlier
        # tiles are fully unmasked so the where is a no-op there).
        s = jnp.where((row >= (k0 + col))[None, :, :], s, _NEG_BIG)

        m_new = jnp.maximum(m_prev, jnp.max(s, axis=-1, keepdims=True))
        alpha = jnp.exp(m_prev - m_new)
        p = jnp.exp(s - m_new)
        l_new = alpha * l_prev + jnp.sum(p, axis=-1, keepdims=True)
        acc_new = alpha * acc_prev + jnp.einsum('hqk,hkd->hqd',
                                                p.astype(bf16), v_t,
                                                preferred_element_type=f32)
        return m_new, l_new, acc_new

    # Causal skip: only ki = 0 .. qi are visited.
    _, l_f, acc_f = jax.lax.fori_loop(0, qi + 1, kv_step, (m0, l0, a0))

    # Softmax normalization via the EUP (approximate reciprocal).
    y_h = acc_f * pl.reciprocal(l_f, approx=True)          # (nh, TQ, hd) f32

    # ---- Accumulating per-head output projection (no head concat/relayout).
    att = jnp.zeros((q_tile, C), f32)
    for hh in range(n_head):
        att = att + jnp.dot(y_h[hh].astype(bf16), w_aproj_ref[hh],
                            preferred_element_type=f32)
    att = att + b_aproj_ref[...]

    x1 = x_ref[pl.ds(q0, q_tile), :] + att                 # residual 1 (f32)

    # ---- MLP branch on this query tile ------------------------------------
    h2 = _layernorm(x1, ln2_g_ref[...], ln2_b_ref[...])
    f = (jnp.dot(h2.astype(bf16), w_fc_ref[...],
                 preferred_element_type=f32) + b_fc_ref[...])
    if gelu_bf16:
        g = _new_gelu(f.astype(bf16))                      # bf16 VPU/EUP (v6e/v7x)
    else:
        g = _new_gelu(f).astype(bf16)                      # f32 math (v5e-safe)
    mo = (jnp.dot(g, w_mproj_ref[...],
                  preferred_element_type=f32) + b_mproj_ref[...])

    o_ref[...] = x1 + mo                                   # residual 2


def _tpu_generation():
    """Best-effort TPU generation (5, 6, 7, ...) from device_kind; None if unknown."""
    try:
        kind = jax.devices()[0].device_kind.lower()
    except Exception:
        return None
    m = re.search(r'(?:tpu\s*v?|v)\s*(\d+)', kind)
    return int(m.group(1)) if m else None


def _pick_q_tile(T, gen):
    # 128 matches v5e's 128-wide MXU; 256 fills v6e/v7x's 256-wide MXU.
    preferred = (128, 256) if (gen is not None and gen <= 5) else (256, 128)
    for cand in preferred:
        if T % cand == 0:
            return cand
    return T  # small T runs as a single tile


def _vmem_limit_bytes(gen):
    if gen is None:
        return 48 * 1024 * 1024    # conservative: fits every generation
    if gen >= 7:
        return 56 * 1024 * 1024    # v7x: 64 MiB physical per TensorCore
    return 96 * 1024 * 1024        # v5e / v6e: 128 MiB physical


def gpt_block(x, params, n_head, q_tile=None, gelu_bf16=False,
              single_buffer_weights=False):
    """Apply one GPT block. `params` matches the torch module (weights stored
    as (in_features, out_features); biases / LN params as (1, features))."""
    B, T, C = x.shape
    assert C % n_head == 0
    hd = C // n_head
    C4 = 4 * C

    gen = _tpu_generation()
    if q_tile is None:
        q_tile = _pick_q_tile(T, gen)
    assert T % q_tile == 0
    nq = T // q_tile

    (ln1_g, ln1_b, w_attn, b_attn, w_aproj, b_aproj,
     ln2_g, ln2_b, w_fc, b_fc, w_mproj, b_mproj) = params

    bf16 = jnp.bfloat16
    # Fold 1/sqrt(hd) into the Q columns of the QKV projection (one-time,
    # wrapper-side) — removes a per-tile (TQ, C) multiply from the kernel.
    scale = 1.0 / math.sqrt(hd)
    qscale = jnp.concatenate([jnp.full((C,), scale, jnp.float32),
                              jnp.ones((2 * C,), jnp.float32)])
    w_attn_s = (w_attn * qscale[None, :]).astype(bf16)
    b_attn_s = b_attn * qscale[None, :]
    # Head-major attention output projection for the accumulating per-head
    # matmul (row h*hd+d of w_aproj multiplies y_h[h, :, d]).
    w_aproj_h = w_aproj.reshape(n_head, hd, C).astype(bf16)

    # Weights become bf16 matmul operands (halves their VMEM/HBM footprint);
    # biases and LN params stay f32 (added onto f32 accumulators).
    args = (ln1_g, ln1_b,
            w_attn_s, b_attn_s,
            w_aproj_h, b_aproj,
            ln2_g, ln2_b,
            w_fc.astype(bf16), b_fc,
            w_mproj.astype(bf16), b_mproj)

    # Whole-array blocks with constant index maps: fetched once, reused for
    # every grid step.  On v7x (64 MiB VMEM) pass single_buffer_weights=True
    # to halve their resident footprint via pl.Buffered(1).
    spec_kwargs = {}
    if single_buffer_weights:
        spec_kwargs["pipeline_mode"] = pl.Buffered(1)

    def ws(shape):
        return pl.BlockSpec(shape, lambda b, q: tuple(0 for _ in shape),
                            **spec_kwargs)

    x_spec = pl.BlockSpec((None, T, C), lambda b, q: (b, 0, 0), **spec_kwargs)

    in_specs = [
        x_spec,                                              # x: per-batch slab
        ws((1, C)), ws((1, C)),                              # ln1 gamma/beta
        ws((C, 3 * C)), ws((1, 3 * C)),                      # attn qkv (Q pre-scaled)
        ws((n_head, hd, C)), ws((1, C)),                     # attn proj (head-major)
        ws((1, C)), ws((1, C)),                              # ln2 gamma/beta
        ws((C, C4)), ws((1, C4)),                            # mlp fc
        ws((C4, C)), ws((1, C)),                             # mlp proj
    ]
    out_spec = pl.BlockSpec((None, q_tile, C), lambda b, q: (b, q, 0))

    kernel = functools.partial(block_kernel, n_head=n_head, q_tile=q_tile,
                               gelu_bf16=gelu_bf16)

    return pl.pallas_call(
        kernel,
        out_shape=jax.ShapeDtypeStruct((B, T, C), jnp.float32),
        grid_spec=pltpu.PrefetchScalarGridSpec(
            num_scalar_prefetch=0,
            grid=(B, nq),                        # batch x query tiles
            in_specs=in_specs,
            out_specs=out_spec,
            # Head-major bf16 Q/K/V cache for the current batch element.
            scratch_shapes=[pltpu.VMEM((n_head, T, hd), jnp.bfloat16),
                            pltpu.VMEM((n_head, T, hd), jnp.bfloat16),
                            pltpu.VMEM((n_head, T, hd), jnp.bfloat16)],
        ),
        compiler_params=pltpu.CompilerParams(
            # Batch axis parallel (megacore sharding on v7x when B >= 2); the
            # query-tile axis must be "arbitrary" because the Q/K/V scratch is
            # carried across it.
            dimension_semantics=("parallel", "arbitrary"),
            vmem_limit_bytes=_vmem_limit_bytes(gen),
        ),
    )(x, *args)


# -------------------- pure-JAX reference for verification --------------------
def gpt_block_ref(x, params, n_head):
    (ln1_g, ln1_b, w_attn, b_attn, w_aproj, b_aproj,
     ln2_g, ln2_b, w_fc, b_fc, w_mproj, b_mproj) = params
    B, T, C = x.shape
    hd = C // n_head

    def ln(v, g, b):
        mu = jnp.mean(v, -1, keepdims=True)
        var = jnp.mean((v - mu) ** 2, -1, keepdims=True)
        return (v - mu) / jnp.sqrt(var + 1e-5) * g + b

    h = ln(x, ln1_g, ln1_b)
    qkv = h @ w_attn + b_attn
    q, k, v = jnp.split(qkv, 3, axis=-1)
    q = q.reshape(B, T, n_head, hd).transpose(0, 2, 1, 3)
    k = k.reshape(B, T, n_head, hd).transpose(0, 2, 1, 3)
    v = v.reshape(B, T, n_head, hd).transpose(0, 2, 1, 3)
    att = (q @ jnp.swapaxes(k, -2, -1)) / math.sqrt(hd)
    mask = jnp.tril(jnp.ones((T, T), bool))
    att = jnp.where(mask, att, -jnp.inf)
    att = jax.nn.softmax(att, axis=-1)
    y = (att @ v).transpose(0, 2, 1, 3).reshape(B, T, C)
    y = y @ w_aproj + b_aproj
    x = x + y
    h2 = ln(x, ln2_g, ln2_b)
    f = h2 @ w_fc + b_fc
    g = 0.5 * f * (1.0 + jnp.tanh(math.sqrt(2.0 / math.pi) * (f + 0.044715 * f ** 3)))
    return x + (g @ w_mproj + b_mproj)


if __name__ == "__main__":
    # small config consistent with the module: n_embd=32, n_head=4, block_size>=T
    B, T, C, n_head = 2, 8, 32, 4
    C4 = 4 * C

    key = jax.random.PRNGKey(0)
    keys = jax.random.split(key, 12)

    params = (
        jnp.ones((1, C), jnp.float32),                                   # ln1 gamma
        jnp.zeros((1, C), jnp.float32),                                  # ln1 beta
        0.02 * jax.random.normal(keys[0], (C, 3 * C), jnp.float32),      # W_attn (in,out)
        0.02 * jax.random.normal(keys[1], (1, 3 * C), jnp.float32),      # b_attn
        0.02 * jax.random.normal(keys[2], (C, C), jnp.float32),          # W_attn_proj
        0.02 * jax.random.normal(keys[3], (1, C), jnp.float32),          # b_attn_proj
        jnp.ones((1, C), jnp.float32),                                   # ln2 gamma
        jnp.zeros((1, C), jnp.float32),                                  # ln2 beta
        0.02 * jax.random.normal(keys[4], (C, C4), jnp.float32),         # W_fc
        0.02 * jax.random.normal(keys[5], (1, C4), jnp.float32),         # b_fc
        0.02 * jax.random.normal(keys[6], (C4, C), jnp.float32),         # W_mlp_proj
        0.02 * jax.random.normal(keys[7], (1, C), jnp.float32),          # b_mlp_proj
    )

    # single query tile (grid = (2, 1))
    x = jax.random.normal(keys[8], (B, T, C), jnp.float32)
    out = jax.block_until_ready(gpt_block(x, params, n_head))
    ref = gpt_block_ref(x, params, n_head)
    assert out.shape == (B, T, C)
    # bf16 matmul operands + approx reciprocal -> slightly loose tolerance
    assert jnp.allclose(out, ref, atol=1e-2, rtol=1e-2), "mismatch vs reference (single tile)"

    # exercise the key-tiled flash path with causal skip: T=16, q_tile=8 -> grid (2, 2)
    x2 = jax.random.normal(keys[9], (B, 16, C), jnp.float32)
    out2 = jax.block_until_ready(gpt_block(x2, params, n_head, q_tile=8))
    ref2 = gpt_block_ref(x2, params, n_head)
    assert out2.shape == (B, 16, C)
    assert jnp.allclose(out2, ref2, atol=1e-2, rtol=1e-2), "mismatch vs reference (tiled)"

    print("KERNEL_OK")
</pallas_src>

<mosaic_0001>
module attributes {stable_mosaic.version = 11 : i64} {
  func.func @block_kernel(%arg0: i32, %arg1: i32, %arg2: memref<1x8x32xf32, #tpu.memory_space<vmem>>, %arg3: memref<1x32xf32, #tpu.memory_space<vmem>>, %arg4: memref<1x32xf32, #tpu.memory_space<vmem>>, %arg5: memref<32x96xbf16, #tpu.memory_space<vmem>>, %arg6: memref<1x96xf32, #tpu.memory_space<vmem>>, %arg7: memref<4x8x32xbf16, #tpu.memory_space<vmem>>, %arg8: memref<1x32xf32, #tpu.memory_space<vmem>>, %arg9: memref<1x32xf32, #tpu.memory_space<vmem>>, %arg10: memref<1x32xf32, #tpu.memory_space<vmem>>, %arg11: memref<32x128xbf16, #tpu.memory_space<vmem>>, %arg12: memref<1x128xf32, #tpu.memory_space<vmem>>, %arg13: memref<128x32xbf16, #tpu.memory_space<vmem>>, %arg14: memref<1x32xf32, #tpu.memory_space<vmem>>, %arg15: memref<1x8x32xf32, #tpu.memory_space<vmem>>, %arg16: memref<4x8x8xbf16, #tpu.memory_space<vmem>>, %arg17: memref<4x8x8xbf16, #tpu.memory_space<vmem>>, %arg18: memref<4x8x8xbf16, #tpu.memory_space<vmem>>) attributes {dimension_semantics = [#tpu.dimension_semantics<parallel>, #tpu.dimension_semantics<arbitrary>], iteration_bounds = array<i64: 2, 1>, scalar_prefetch = 0 : i64, scratch_operands = 3 : i64, tpu.core_type = #tpu.core_type<tc>, window_params = [{transform_indices = @transform_0, window_bounds = array<i64: 1, 8, 32>}, {pipeline_mode = #tpu.pipeline_mode<synchronous>, transform_indices = @transform_1, window_bounds = array<i64: 1, 32>}, {pipeline_mode = #tpu.pipeline_mode<synchronous>, transform_indices = @transform_2, window_bounds = array<i64: 1, 32>}, {pipeline_mode = #tpu.pipeline_mode<synchronous>, transform_indices = @transform_3, window_bounds = array<i64: 32, 96>}, {pipeline_mode = #tpu.pipeline_mode<synchronous>, transform_indices = @transform_4, window_bounds = array<i64: 1, 96>}, {pipeline_mode = #tpu.pipeline_mode<synchronous>, transform_indices = @transform_5, window_bounds = array<i64: 4, 8, 32>}, {pipeline_mode = #tpu.pipeline_mode<synchronous>, transform_indices = @transform_6, window_bounds = array<i64: 1, 32>}, {pipeline_mode = #tpu.pipeline_mode<synchronous>, transform_indices = @transform_7, window_bounds = array<i64: 1, 32>}, {pipeline_mode = #tpu.pipeline_mode<synchronous>, transform_indices = @transform_8, window_bounds = array<i64: 1, 32>}, {pipeline_mode = #tpu.pipeline_mode<synchronous>, transform_indices = @transform_9, window_bounds = array<i64: 32, 128>}, {pipeline_mode = #tpu.pipeline_mode<synchronous>, transform_indices = @transform_10, window_bounds = array<i64: 1, 128>}, {pipeline_mode = #tpu.pipeline_mode<synchronous>, transform_indices = @transform_11, window_bounds = array<i64: 128, 32>}, {pipeline_mode = #tpu.pipeline_mode<synchronous>, transform_indices = @transform_12, window_bounds = array<i64: 1, 32>}, {transform_indices = @transform_13, window_bounds = array<i64: 1, 8, 32>}]} {
    %c8_i32 = arith.constant 8 : i32
    %0 = arith.muli %arg1, %c8_i32 : i32
    %1 = tpu.assume_multiple %0, 8 : i32
    %c0_i32 = arith.constant 0 : i32
    %2 = arith.cmpi eq, %arg1, %c0_i32 : i32
    %3 = arith.extui %2 : i1 to i32
    %c0_i32_0 = arith.constant 0 : i32
    %4 = arith.cmpi ne, %3, %c0_i32_0 : i32
    scf.if %4 {
      %c0_50 = arith.constant 0 : index
      %c0_51 = arith.constant 0 : index
      %c0_52 = arith.constant 0 : index
      %110 = vector.load %arg2[%c0_50, %c0_51, %c0_52] : memref<1x8x32xf32, #tpu.memory_space<vmem>>, vector<1x8x32xf32>
      %111 = vector.shape_cast %110 : vector<1x8x32xf32> to vector<8x32xf32>
      %c0_53 = arith.constant 0 : index
      %c0_54 = arith.constant 0 : index
      %112 = vector.load %arg3[%c0_53, %c0_54] : memref<1x32xf32, #tpu.memory_space<vmem>>, vector<1x32xf32>
      %c0_55 = arith.constant 0 : index
      %c0_56 = arith.constant 0 : index
      %113 = vector.load %arg4[%c0_55, %c0_56] : memref<1x32xf32, #tpu.memory_space<vmem>>, vector<1x32xf32>
      %cst_57 = arith.constant dense<0.000000e+00> : vector<8xf32>
      %114 = vector.multi_reduction <add>, %111, %cst_57 [1] : vector<8x32xf32> to vector<8xf32>
      %115 = vector.shape_cast %114 : vector<8xf32> to vector<8x1xf32>
      %cst_58 = arith.constant 3.200000e+01 : f32
      %116 = vector.broadcast %cst_58 : f32 to vector<8x1xf32>
      %117 = arith.divf %115, %116 : vector<8x1xf32>
      %118 = vector.broadcast %117 : vector<8x1xf32> to vector<8x32xf32>
      %119 = arith.subf %111, %118 : vector<8x32xf32>
      %120 = arith.mulf %119, %119 : vector<8x32xf32>
      %cst_59 = arith.constant dense<0.000000e+00> : vector<8xf32>
      %121 = vector.multi_reduction <add>, %120, %cst_59 [1] : vector<8x32xf32> to vector<8xf32>
      %122 = vector.shape_cast %121 : vector<8xf32> to vector<8x1xf32>
      %cst_60 = arith.constant 3.200000e+01 : f32
      %123 = vector.broadcast %cst_60 : f32 to vector<8x1xf32>
      %124 = arith.divf %122, %123 : vector<8x1xf32>
      %125 = vector.broadcast %117 : vector<8x1xf32> to vector<8x32xf32>
      %126 = arith.subf %111, %125 : vector<8x32xf32>
      %cst_61 = arith.constant 9.99999974E-6 : f32
      %127 = vector.broadcast %cst_61 : f32 to vector<8x1xf32>
      %128 = arith.addf %124, %127 : vector<8x1xf32>
      %129 = math.rsqrt %128 : vector<8x1xf32>
      %130 = vector.broadcast %129 : vector<8x1xf32> to vector<8x32xf32>
      %131 = arith.mulf %126, %130 : vector<8x32xf32>
      %132 = vector.broadcast %112 : vector<1x32xf32> to vector<8x32xf32>
      %133 = arith.mulf %131, %132 : vector<8x32xf32>
      %134 = vector.broadcast %113 : vector<1x32xf32> to vector<8x32xf32>
      %135 = arith.addf %133, %134 : vector<8x32xf32>
      %136 = arith.truncf %135 : vector<8x32xf32> to vector<8x32xbf16>
      %c0_62 = arith.constant 0 : index
      %c0_63 = arith.constant 0 : index
      %137 = vector.load %arg5[%c0_62, %c0_63] : memref<32x96xbf16, #tpu.memory_space<vmem>>, vector<32x96xbf16>
      %cst_64 = arith.constant dense<0.000000e+00> : vector<8x96xf32>
      %138 = tpu.matmul %136, %137, %cst_64 {dimension_numbers = #tpu.dot_dimension_numbers<[1], [0], [0], [1], [0, 0, 1, 1], [], []>} : vector<8x32xbf16>, vector<32x96xbf16>, vector<8x96xf32> -> vector<8x96xf32>
      %c0_65 = arith.constant 0 : index
      %c0_66 = arith.constant 0 : index
      %139 = vector.load %arg6[%c0_65, %c0_66] : memref<1x96xf32, #tpu.memory_space<vmem>>, vector<1x96xf32>
      %140 = vector.broadcast %139 : vector<1x96xf32> to vector<8x96xf32>
      %141 = arith.addf %138, %140 : vector<8x96xf32>
      %142 = vector.extract_strided_slice %141 {offsets = [0, 0], sizes = [8, 8], strides = [1, 1]} : vector<8x96xf32> to vector<8x8xf32>
      %143 = arith.truncf %142 : vector<8x8xf32> to vector<8x8xbf16>
      %c0_67 = arith.constant 0 : index
      %c0_68 = arith.constant 0 : index
      %c0_69 = arith.constant 0 : index
      %144 = vector.load %arg16[%c0_67, %c0_68, %c0_69] : memref<4x8x8xbf16, #tpu.memory_space<vmem>>, vector<1x8x8xbf16>
      %145 = vector.shape_cast %144 : vector<1x8x8xbf16> to vector<8x8xbf16>
      %146 = vector.shape_cast %143 : vector<8x8xbf16> to vector<1x8x8xbf16>
      tpu.vector_store %arg16[%c0_67, %c0_68, %c0_69], %146 {strides = array<i32>} : memref<4x8x8xbf16, #tpu.memory_space<vmem>>, vector<1x8x8xbf16>,
      %147 = vector.extract_strided_slice %141 {offsets = [0, 32], sizes = [8, 8], strides = [1, 1]} : vector<8x96xf32> to vector<8x8xf32>
      %148 = arith.truncf %147 : vector<8x8xf32> to vector<8x8xbf16>
      %c0_70 = arith.constant 0 : index
      %c0_71 = arith.constant 0 : index
      %c0_72 = arith.constant 0 : index
      %149 = vector.load %arg17[%c0_70, %c0_71, %c0_72] : memref<4x8x8xbf16, #tpu.memory_space<vmem>>, vector<1x8x8xbf16>
      %150 = vector.shape_cast %149 : vector<1x8x8xbf16> to vector<8x8xbf16>
      %151 = vector.shape_cast %148 : vector<8x8xbf16> to vector<1x8x8xbf16>
      tpu.vector_store %arg17[%c0_70, %c0_71, %c0_72], %151 {strides = array<i32>} : memref<4x8x8xbf16, #tpu.memory_space<vmem>>, vector<1x8x8xbf16>,
      %152 = vector.extract_strided_slice %141 {offsets = [0, 64], sizes = [8, 8], strides = [1, 1]} : vector<8x96xf32> to vector<8x8xf32>
      %153 = arith.truncf %152 : vector<8x8xf32> to vector<8x8xbf16>
      %c0_73 = arith.constant 0 : index
      %c0_74 = arith.constant 0 : index
      %c0_75 = arith.constant 0 : index
      %154 = vector.load %arg18[%c0_73, %c0_74, %c0_75] : memref<4x8x8xbf16, #tpu.memory_space<vmem>>, vector<1x8x8xbf16>
      %155 = vector.shape_cast %154 : vector<1x8x8xbf16> to vector<8x8xbf16>
      %156 = vector.shape_cast %153 : vector<8x8xbf16> to vector<1x8x8xbf16>
      tpu.vector_store %arg18[%c0_73, %c0_74, %c0_75], %156 {strides = array<i32>} : memref<4x8x8xbf16, #tpu.memory_space<vmem>>, vector<1x8x8xbf16>,
      %157 = vector.extract_strided_slice %141 {offsets = [0, 8], sizes = [8, 8], strides = [1, 1]} : vector<8x96xf32> to vector<8x8xf32>
      %158 = arith.truncf %157 : vector<8x8xf32> to vector<8x8xbf16>
      %c1_76 = arith.constant 1 : index
      %c0_77 = arith.constant 0 : index
      %c0_78 = arith.constant 0 : index
      %159 = vector.load %arg16[%c1_76, %c0_77, %c0_78] : memref<4x8x8xbf16, #tpu.memory_space<vmem>>, vector<1x8x8xbf16>
      %160 = vector.shape_cast %159 : vector<1x8x8xbf16> to vector<8x8xbf16>
      %161 = vector.shape_cast %158 : vector<8x8xbf16> to vector<1x8x8xbf16>
      tpu.vector_store %arg16[%c1_76, %c0_77, %c0_78], %161 {strides = array<i32>} : memref<4x8x8xbf16, #tpu.memory_space<vmem>>, vector<1x8x8xbf16>,
      %162 = vector.extract_strided_slice %141 {offsets = [0, 40], sizes = [8, 8], strides = [1, 1]} : vector<8x96xf32> to vector<8x8xf32>
      %163 = arith.truncf %162 : vector<8x8xf32> to vector<8x8xbf16>
      %c1_79 = arith.constant 1 : index
      %c0_80 = arith.constant 0 : index
      %c0_81 = arith.constant 0 : index
      %164 = vector.load %arg17[%c1_79, %c0_80, %c0_81] : memref<4x8x8xbf16, #tpu.memory_space<vmem>>, vector<1x8x8xbf16>
      %165 = vector.shape_cast %164 : vector<1x8x8xbf16> to vector<8x8xbf16>
      %166 = vector.shape_cast %163 : vector<8x8xbf16> to vector<1x8x8xbf16>
      tpu.vector_store %arg17[%c1_79, %c0_80, %c0_81], %166 {strides = array<i32>} : memref<4x8x8xbf16, #tpu.memory_space<vmem>>, vector<1x8x8xbf16>,
      %167 = vector.extract_strided_slice %141 {offsets = [0, 72], sizes = [8, 8], strides = [1, 1]} : vector<8x96xf32> to vector<8x8xf32>
      %168 = arith.truncf %167 : vector<8x8xf32> to vector<8x8xbf16>
      %c1_82 = arith.constant 1 : index
      %c0_83 = arith.constant 0 : index
      %c0_84 = arith.constant 0 : index
      %169 = vector.load %arg18[%c1_82, %c0_83, %c0_84] : memref<4x8x8xbf16, #tpu.memory_space<vmem>>, vector<1x8x8xbf16>
      %170 = vector.shape_cast %169 : vector<1x8x8xbf16> to vector<8x8xbf16>
      %171 = vector.shape_cast %168 : vector<8x8xbf16> to vector<1x8x8xbf16>
      tpu.vector_store %arg18[%c1_82, %c0_83, %c0_84], %171 {strides = array<i32>} : memref<4x8x8xbf16, #tpu.memory_space<vmem>>, vector<1x8x8xbf16>,
      %172 = vector.extract_strided_slice %141 {offsets = [0, 16], sizes = [8, 8], strides = [1, 1]} : vector<8x96xf32> to vector<8x8xf32>
      %173 = arith.truncf %172 : vector<8x8xf32> to vector<8x8xbf16>
      %c2_85 = arith.constant 2 : index
      %c0_86 = arith.constant 0 : index
      %c0_87 = arith.constant 0 : index
      %174 = vector.load %arg16[%c2_85, %c0_86, %c0_87] : memref<4x8x8xbf16, #tpu.memory_space<vmem>>, vector<1x8x8xbf16>
      %175 = vector.shape_cast %174 : vector<1x8x8xbf16> to vector<8x8xbf16>
      %176 = vector.shape_cast %173 : vector<8x8xbf16> to vector<1x8x8xbf16>
      tpu.vector_store %arg16[%c2_85, %c0_86, %c0_87], %176 {strides = array<i32>} : memref<4x8x8xbf16, #tpu.memory_space<vmem>>, vector<1x8x8xbf16>,
      %177 = vector.extract_strided_slice %141 {offsets = [0, 48], sizes = [8, 8], strides = [1, 1]} : vector<8x96xf32> to vector<8x8xf32>
      %178 = arith.truncf %177 : vector<8x8xf32> to vector<8x8xbf16>
      %c2_88 = arith.constant 2 : index
      %c0_89 = arith.constant 0 : index
      %c0_90 = arith.constant 0 : index
      %179 = vector.load %arg17[%c2_88, %c0_89, %c0_90] : memref<4x8x8xbf16, #tpu.memory_space<vmem>>, vector<1x8x8xbf16>
      %180 = vector.shape_cast %179 : vector<1x8x8xbf16> to vector<8x8xbf16>
      %181 = vector.shape_cast %178 : vector<8x8xbf16> to vector<1x8x8xbf16>
      tpu.vector_store %arg17[%c2_88, %c0_89, %c0_90], %181 {strides = array<i32>} : memref<4x8x8xbf16, #tpu.memory_space<vmem>>, vector<1x8x8xbf16>,
      %182 = vector.extract_strided_slice %141 {offsets = [0, 80], sizes = [8, 8], strides = [1, 1]} : vector<8x96xf32> to vector<8x8xf32>
      %183 = arith.truncf %182 : vector<8x8xf32> to vector<8x8xbf16>
      %c2_91 = arith.constant 2 : index
      %c0_92 = arith.constant 0 : index
      %c0_93 = arith.constant 0 : index
      %184 = vector.load %arg18[%c2_91, %c0_92, %c0_93] : memref<4x8x8xbf16, #tpu.memory_space<vmem>>, vector<1x8x8xbf16>
      %185 = vector.shape_cast %184 : vector<1x8x8xbf16> to vector<8x8xbf16>
      %186 = vector.shape_cast %183 : vector<8x8xbf16> to vector<1x8x8xbf16>
      tpu.vector_store %arg18[%c2_91, %c0_92, %c0_93], %186 {strides = array<i32>} : memref<4x8x8xbf16, #tpu.memory_space<vmem>>, vector<1x8x8xbf16>,
      %187 = vector.extract_strided_slice %141 {offsets = [0, 24], sizes = [8, 8], strides = [1, 1]} : vector<8x96xf32> to vector<8x8xf32>
      %188 = arith.truncf %187 : vector<8x8xf32> to vector<8x8xbf16>
      %c3_94 = arith.constant 3 : index
      %c0_95 = arith.constant 0 : index
      %c0_96 = arith.constant 0 : index
      %189 = vector.load %arg16[%c3_94, %c0_95, %c0_96] : memref<4x8x8xbf16, #tpu.memory_space<vmem>>, vector<1x8x8xbf16>
      %190 = vector.shape_cast %189 : vector<1x8x8xbf16> to vector<8x8xbf16>
      %191 = vector.shape_cast %188 : vector<8x8xbf16> to vector<1x8x8xbf16>
      tpu.vector_store %arg16[%c3_94, %c0_95, %c0_96], %191 {strides = array<i32>} : memref<4x8x8xbf16, #tpu.memory_space<vmem>>, vector<1x8x8xbf16>,
      %192 = vector.extract_strided_slice %141 {offsets = [0, 56], sizes = [8, 8], strides = [1, 1]} : vector<8x96xf32> to vector<8x8xf32>
      %193 = arith.truncf %192 : vector<8x8xf32> to vector<8x8xbf16>
      %c3_97 = arith.constant 3 : index
      %c0_98 = arith.constant 0 : index
      %c0_99 = arith.constant 0 : index
      %194 = vector.load %arg17[%c3_97, %c0_98, %c0_99] : memref<4x8x8xbf16, #tpu.memory_space<vmem>>, vector<1x8x8xbf16>
      %195 = vector.shape_cast %194 : vector<1x8x8xbf16> to vector<8x8xbf16>
      %196 = vector.shape_cast %193 : vector<8x8xbf16> to vector<1x8x8xbf16>
      tpu.vector_store %arg17[%c3_97, %c0_98, %c0_99], %196 {strides = array<i32>} : memref<4x8x8xbf16, #tpu.memory_space<vmem>>, vector<1x8x8xbf16>,
      %197 = vector.extract_strided_slice %141 {offsets = [0, 88], sizes = [8, 8], strides = [1, 1]} : vector<8x96xf32> to vector<8x8xf32>
      %198 = arith.truncf %197 : vector<8x8xf32> to vector<8x8xbf16>
      %c3_100 = arith.constant 3 : index
      %c0_101 = arith.constant 0 : index
      %c0_102 = arith.constant 0 : index
      %199 = vector.load %arg18[%c3_100, %c0_101, %c0_102] : memref<4x8x8xbf16, #tpu.memory_space<vmem>>, vector<1x8x8xbf16>
      %200 = vector.shape_cast %199 : vector<1x8x8xbf16> to vector<8x8xbf16>
      %201 = vector.shape_cast %198 : vector<8x8xbf16> to vector<1x8x8xbf16>
      tpu.vector_store %arg18[%c3_100, %c0_101, %c0_102], %201 {strides = array<i32>} : memref<4x8x8xbf16, #tpu.memory_space<vmem>>, vector<1x8x8xbf16>,
    } else {
    }
    %c0 = arith.constant 0 : index
    %5 = arith.index_cast %1 : i32 to index
    %c0_1 = arith.constant 0 : index
    %6 = vector.load %arg16[%c0, %5, %c0_1] : memref<4x8x8xbf16, #tpu.memory_space<vmem>>, vector<4x8x8xbf16>
    %7 = tpu.iota {dimensions = array<i32: 0>} : vector<8x8xi32>
    %8 = vector.broadcast %1 : i32 to vector<8x8xi32>
    %9 = arith.addi %8, %7 : vector<8x8xi32>
    %10 = tpu.iota {dimensions = array<i32: 1>} : vector<8x8xi32>
    %cst = arith.constant -1.000000e+30 : f32
    %11 = vector.broadcast %cst : f32 to vector<4x8x1xf32>
    %cst_2 = arith.constant 0.000000e+00 : f32
    %12 = vector.broadcast %cst_2 : f32 to vector<4x8x1xf32>
    %cst_3 = arith.constant 0.000000e+00 : f32
    %13 = vector.broadcast %cst_3 : f32 to vector<4x8x8xf32>
    %c1_i32 = arith.constant 1 : i32
    %14 = arith.addi %arg1, %c1_i32 : i32
    %c0_i32_4 = arith.constant 0 : i32
    %15 = arith.subi %14, %c0_i32_4 : i32
    %16 = arith.addi %c0_i32_4, %15 : i32
    %c1_i32_5 = arith.constant 1 : i32
    %17:3 = scf.for %arg19 = %c0_i32_4 to %16 step %c1_i32_5 iter_args(%arg20 = %11, %arg21 = %12, %arg22 = %13) -> (vector<4x8x1xf32>, vector<4x8x1xf32>, vector<4x8x8xf32>)  : i32 {
      %c8_i32_50 = arith.constant 8 : i32
      %110 = arith.muli %arg19, %c8_i32_50 : i32
      %111 = tpu.assume_multiple %110, 8 : i32
      %c0_51 = arith.constant 0 : index
      %112 = arith.index_cast %111 : i32 to index
      %c0_52 = arith.constant 0 : index
      %113 = vector.load %arg17[%c0_51, %112, %c0_52] : memref<4x8x8xbf16, #tpu.memory_space<vmem>>, vector<4x8x8xbf16>
      %c0_53 = arith.constant 0 : index
      %114 = arith.index_cast %111 : i32 to index
      %c0_54 = arith.constant 0 : index
      %115 = vector.load %arg18[%c0_53, %114, %c0_54] : memref<4x8x8xbf16, #tpu.memory_space<vmem>>, vector<4x8x8xbf16>
      "tpu.trace_start"() <{level = 10 : i32, message = "hqd,hkd->hqk"}> : () -> ()
      %cst_55 = arith.constant dense<0.000000e+00> : vector<4x8x8xf32>
      %116 = tpu.matmul %6, %113, %cst_55 {dimension_numbers = #tpu.dot_dimension_numbers<[2], [2], [1], [1], [0, 0, 0, 1, 1, 1], [0], [0]>} : vector<4x8x8xbf16>, vector<4x8x8xbf16>, vector<4x8x8xf32> -> vector<4x8x8xf32>
      "tpu.trace_stop"() : () -> ()
      %117 = vector.broadcast %111 : i32 to vector<8x8xi32>
      %118 = arith.addi %117, %10 : vector<8x8xi32>
      %119 = arith.cmpi sge, %9, %118 : vector<8x8xi32>
      %120 = vector.shape_cast %119 : vector<8x8xi1> to vector<1x8x8xi1>
      %cst_56 = arith.constant -1.000000e+30 : f32
      %121 = vector.shape_cast %120 : vector<1x8x8xi1> to vector<1x8x8xi1>
      %122 = vector.broadcast %121 : vector<1x8x8xi1> to vector<4x8x8xi1>
      %123 = vector.broadcast %cst_56 : f32 to vector<4x8x8xf32>
      %124 = arith.select %122, %116, %123 : vector<4x8x8xi1>, vector<4x8x8xf32>
      %cst_57 = arith.constant dense<0xFF800000> : vector<4x8xf32>
      %125 = vector.multi_reduction <maximumf>, %124, %cst_57 [2] : vector<4x8x8xf32> to vector<4x8xf32>
      %126 = vector.shape_cast %125 : vector<4x8xf32> to vector<4x8x1xf32>
      %127 = arith.maximumf %arg20, %126 : vector<4x8x1xf32>
      %128 = arith.subf %arg20, %127 : vector<4x8x1xf32>
      %129 = math.exp %128 : vector<4x8x1xf32>
      %130 = vector.broadcast %127 : vector<4x8x1xf32> to vector<4x8x8xf32>
      %131 = arith.subf %124, %130 : vector<4x8x8xf32>
      %132 = math.exp %131 : vector<4x8x8xf32>
      %133 = arith.mulf %129, %arg21 : vector<4x8x1xf32>
      %cst_58 = arith.constant dense<0.000000e+00> : vector<4x8xf32>
      %134 = vector.multi_reduction <add>, %132, %cst_58 [2] : vector<4x8x8xf32> to vector<4x8xf32>
      %135 = vector.shape_cast %134 : vector<4x8xf32> to vector<4x8x1xf32>
      %136 = arith.addf %133, %135 : vector<4x8x1xf32>
      %137 = vector.broadcast %129 : vector<4x8x1xf32> to vector<4x8x8xf32>
      %138 = arith.mulf %137, %arg22 : vector<4x8x8xf32>
      %139 = arith.truncf %132 : vector<4x8x8xf32> to vector<4x8x8xbf16>
      "tpu.trace_start"() <{level = 10 : i32, message = "hqk,hkd->hqd"}> : () -> ()
      %cst_59 = arith.constant dense<0.000000e+00> : vector<4x8x8xf32>
      %140 = tpu.matmul %139, %115, %cst_59 {dimension_numbers = #tpu.dot_dimension_numbers<[2], [1], [1], [2], [0, 0, 0, 1, 1, 2], [0], [0]>} : vector<4x8x8xbf16>, vector<4x8x8xbf16>, vector<4x8x8xf32> -> vector<4x8x8xf32>
      "tpu.trace_stop"() : () -> ()
      %141 = arith.addf %138, %140 : vector<4x8x8xf32>
      scf.yield %127, %136, %141 : vector<4x8x1xf32>, vector<4x8x1xf32>, vector<4x8x8xf32>
    }
    %18 = tpu.reciprocal %17#1 {approx = true} : vector<4x8x1xf32> -> vector<4x8x1xf32>
    %19 = vector.broadcast %18 : vector<4x8x1xf32> to vector<4x8x8xf32>
    %20 = arith.mulf %17#2, %19 : vector<4x8x8xf32>
    %cst_6 = arith.constant 0.000000e+00 : f32
    %21 = vector.broadcast %cst_6 : f32 to vector<8x32xf32>
    %22 = vector.extract_strided_slice %20 {offsets = [0, 0, 0], sizes = [1, 8, 8], strides = [1, 1, 1]} : vector<4x8x8xf32> to vector<1x8x8xf32>
    %23 = vector.shape_cast %22 : vector<1x8x8xf32> to vector<8x8xf32>
    %24 = arith.truncf %23 : vector<8x8xf32> to vector<8x8xbf16>
    %c0_7 = arith.constant 0 : index
    %c0_8 = arith.constant 0 : index
    %c0_9 = arith.constant 0 : index
    %25 = vector.load %arg7[%c0_7, %c0_8, %c0_9] : memref<4x8x32xbf16, #tpu.memory_space<vmem>>, vector<1x8x32xbf16>
    %26 = vector.shape_cast %25 : vector<1x8x32xbf16> to vector<8x32xbf16>
    %cst_10 = arith.constant dense<0.000000e+00> : vector<8x32xf32>
    %27 = tpu.matmul %24, %26, %cst_10 {dimension_numbers = #tpu.dot_dimension_numbers<[1], [0], [0], [1], [0, 0, 1, 1], [], []>} : vector<8x8xbf16>, vector<8x32xbf16>, vector<8x32xf32> -> vector<8x32xf32>
    %28 = arith.addf %21, %27 : vector<8x32xf32>
    %29 = vector.extract_strided_slice %20 {offsets = [1, 0, 0], sizes = [1, 8, 8], strides = [1, 1, 1]} : vector<4x8x8xf32> to vector<1x8x8xf32>
    %30 = vector.shape_cast %29 : vector<1x8x8xf32> to vector<8x8xf32>
    %31 = arith.truncf %30 : vector<8x8xf32> to vector<8x8xbf16>
    %c1 = arith.constant 1 : index
    %c0_11 = arith.constant 0 : index
    %c0_12 = arith.constant 0 : index
    %32 = vector.load %arg7[%c1, %c0_11, %c0_12] : memref<4x8x32xbf16, #tpu.memory_space<vmem>>, vector<1x8x32xbf16>
    %33 = vector.shape_cast %32 : vector<1x8x32xbf16> to vector<8x32xbf16>
    %cst_13 = arith.constant dense<0.000000e+00> : vector<8x32xf32>
    %34 = tpu.matmul %31, %33, %cst_13 {dimension_numbers = #tpu.dot_dimension_numbers<[1], [0], [0], [1], [0, 0, 1, 1], [], []>} : vector<8x8xbf16>, vector<8x32xbf16>, vector<8x32xf32> -> vector<8x32xf32>
    %35 = arith.addf %28, %34 : vector<8x32xf32>
    %36 = vector.extract_strided_slice %20 {offsets = [2, 0, 0], sizes = [1, 8, 8], strides = [1, 1, 1]} : vector<4x8x8xf32> to vector<1x8x8xf32>
    %37 = vector.shape_cast %36 : vector<1x8x8xf32> to vector<8x8xf32>
    %38 = arith.truncf %37 : vector<8x8xf32> to vector<8x8xbf16>
    %c2 = arith.constant 2 : index
    %c0_14 = arith.constant 0 : index
    %c0_15 = arith.constant 0 : index
    %39 = vector.load %arg7[%c2, %c0_14, %c0_15] : memref<4x8x32xbf16, #tpu.memory_space<vmem>>, vector<1x8x32xbf16>
    %40 = vector.shape_cast %39 : vector<1x8x32xbf16> to vector<8x32xbf16>
    %cst_16 = arith.constant dense<0.000000e+00> : vector<8x32xf32>
    %41 = tpu.matmul %38, %40, %cst_16 {dimension_numbers = #tpu.dot_dimension_numbers<[1], [0], [0], [1], [0, 0, 1, 1], [], []>} : vector<8x8xbf16>, vector<8x32xbf16>, vector<8x32xf32> -> vector<8x32xf32>
    %42 = arith.addf %35, %41 : vector<8x32xf32>
    %43 = vector.extract_strided_slice %20 {offsets = [3, 0, 0], sizes = [1, 8, 8], strides = [1, 1, 1]} : vector<4x8x8xf32> to vector<1x8x8xf32>
    %44 = vector.shape_cast %43 : vector<1x8x8xf32> to vector<8x8xf32>
    %45 = arith.truncf %44 : vector<8x8xf32> to vector<8x8xbf16>
    %c3 = arith.constant 3 : index
    %c0_17 = arith.constant 0 : index
    %c0_18 = arith.constant 0 : index
    %46 = vector.load %arg7[%c3, %c0_17, %c0_18] : memref<4x8x32xbf16, #tpu.memory_space<vmem>>, vector<1x8x32xbf16>
    %47 = vector.shape_cast %46 : vector<1x8x32xbf16> to vector<8x32xbf16>
    %cst_19 = arith.constant dense<0.000000e+00> : vector<8x32xf32>
    %48 = tpu.matmul %45, %47, %cst_19 {dimension_numbers = #tpu.dot_dimension_numbers<[1], [0], [0], [1], [0, 0, 1, 1], [], []>} : vector<8x8xbf16>, vector<8x32xbf16>, vector<8x32xf32> -> vector<8x32xf32>
    %49 = arith.addf %42, %48 : vector<8x32xf32>
    %c0_20 = arith.constant 0 : index
    %c0_21 = arith.constant 0 : index
    %50 = vector.load %arg8[%c0_20, %c0_21] : memref<1x32xf32, #tpu.memory_space<vmem>>, vector<1x32xf32>
    %51 = vector.broadcast %50 : vector<1x32xf32> to vector<8x32xf32>
    %52 = arith.addf %49, %51 : vector<8x32xf32>
    %c0_22 = arith.constant 0 : index
    %53 = arith.index_cast %1 : i32 to index
    %c0_23 = arith.constant 0 : index
    %54 = vector.load %arg2[%c0_22, %53, %c0_23] : memref<1x8x32xf32, #tpu.memory_space<vmem>>, vector<1x8x32xf32>
    %55 = vector.shape_cast %54 : vector<1x8x32xf32> to vector<8x32xf32>
    %56 = arith.addf %55, %52 : vector<8x32xf32>
    %c0_24 = arith.constant 0 : index
    %c0_25 = arith.constant 0 : index
    %57 = vector.load %arg9[%c0_24, %c0_25] : memref<1x32xf32, #tpu.memory_space<vmem>>, vector<1x32xf32>
    %c0_26 = arith.constant 0 : index
    %c0_27 = arith.constant 0 : index
    %58 = vector.load %arg10[%c0_26, %c0_27] : memref<1x32xf32, #tpu.memory_space<vmem>>, vector<1x32xf32>
    %cst_28 = arith.constant dense<0.000000e+00> : vector<8xf32>
    %59 = vector.multi_reduction <add>, %56, %cst_28 [1] : vector<8x32xf32> to vector<8xf32>
    %60 = vector.shape_cast %59 : vector<8xf32> to vector<8x1xf32>
    %cst_29 = arith.constant 3.200000e+01 : f32
    %61 = vector.broadcast %cst_29 : f32 to vector<8x1xf32>
    %62 = arith.divf %60, %61 : vector<8x1xf32>
    %63 = vector.broadcast %62 : vector<8x1xf32> to vector<8x32xf32>
    %64 = arith.subf %56, %63 : vector<8x32xf32>
    %65 = arith.mulf %64, %64 : vector<8x32xf32>
    %cst_30 = arith.constant dense<0.000000e+00> : vector<8xf32>
    %66 = vector.multi_reduction <add>, %65, %cst_30 [1] : vector<8x32xf32> to vector<8xf32>
    %67 = vector.shape_cast %66 : vector<8xf32> to vector<8x1xf32>
    %cst_31 = arith.constant 3.200000e+01 : f32
    %68 = vector.broadcast %cst_31 : f32 to vector<8x1xf32>
    %69 = arith.divf %67, %68 : vector<8x1xf32>
    %70 = vector.broadcast %62 : vector<8x1xf32> to vector<8x32xf32>
    %71 = arith.subf %56, %70 : vector<8x32xf32>
    %cst_32 = arith.constant 9.99999974E-6 : f32
    %72 = vector.broadcast %cst_32 : f32 to vector<8x1xf32>
    %73 = arith.addf %69, %72 : vector<8x1xf32>
    %74 = math.rsqrt %73 : vector<8x1xf32>
    %75 = vector.broadcast %74 : vector<8x1xf32> to vector<8x32xf32>
    %76 = arith.mulf %71, %75 : vector<8x32xf32>
    %77 = vector.broadcast %57 : vector<1x32xf32> to vector<8x32xf32>
    %78 = arith.mulf %76, %77 : vector<8x32xf32>
    %79 = vector.broadcast %58 : vector<1x32xf32> to vector<8x32xf32>
    %80 = arith.addf %78, %79 : vector<8x32xf32>
    %81 = arith.truncf %80 : vector<8x32xf32> to vector<8x32xbf16>
    %c0_33 = arith.constant 0 : index
    %c0_34 = arith.constant 0 : index
    %82 = vector.load %arg11[%c0_33, %c0_34] : memref<32x128xbf16, #tpu.memory_space<vmem>>, vector<32x128xbf16>
    %cst_35 = arith.constant dense<0.000000e+00> : vector<8x128xf32>
    %83 = tpu.matmul %81, %82, %cst_35 {dimension_numbers = #tpu.dot_dimension_numbers<[1], [0], [0], [1], [0, 0, 1, 1], [], []>} : vector<8x32xbf16>, vector<32x128xbf16>, vector<8x128xf32> -> vector<8x128xf32>
    %c0_36 = arith.constant 0 : index
    %c0_37 = arith.constant 0 : index
    %84 = vector.load %arg12[%c0_36, %c0_37] : memref<1x128xf32, #tpu.memory_space<vmem>>, vector<1x128xf32>
    %85 = vector.broadcast %84 : vector<1x128xf32> to vector<8x128xf32>
    %86 = arith.addf %83, %85 : vector<8x128xf32>
    %cst_38 = arith.constant 5.000000e-01 : f32
    %87 = vector.broadcast %cst_38 : f32 to vector<8x128xf32>
    %88 = arith.mulf %87, %86 : vector<8x128xf32>
    %89 = arith.mulf %86, %86 : vector<8x128xf32>
    %90 = arith.mulf %86, %89 : vector<8x128xf32>
    %cst_39 = arith.constant 4.471500e-02 : f32
    %91 = vector.broadcast %cst_39 : f32 to vector<8x128xf32>
    %92 = arith.mulf %91, %90 : vector<8x128xf32>
    %93 = arith.addf %86, %92 : vector<8x128xf32>
    %cst_40 = arith.constant 0.797884583 : f32
    %94 = vector.broadcast %cst_40 : f32 to vector<8x128xf32>
    %95 = arith.mulf %94, %93 : vector<8x128xf32>
    %96 = math.tanh %95 : vector<8x128xf32>
    %cst_41 = arith.constant 1.000000e+00 : f32
    %97 = vector.broadcast %cst_41 : f32 to vector<8x128xf32>
    %98 = arith.addf %97, %96 : vector<8x128xf32>
    %99 = arith.mulf %88, %98 : vector<8x128xf32>
    %100 = arith.truncf %99 : vector<8x128xf32> to vector<8x128xbf16>
    %c0_42 = arith.constant 0 : index
    %c0_43 = arith.constant 0 : index
    %101 = vector.load %arg13[%c0_42, %c0_43] : memref<128x32xbf16, #tpu.memory_space<vmem>>, vector<128x32xbf16>
    %cst_44 = arith.constant dense<0.000000e+00> : vector<8x32xf32>
    %102 = tpu.matmul %100, %101, %cst_44 {dimension_numbers = #tpu.dot_dimension_numbers<[1], [0], [0], [1], [0, 0, 1, 1], [], []>} : vector<8x128xbf16>, vector<128x32xbf16>, vector<8x32xf32> -> vector<8x32xf32>
    %c0_45 = arith.constant 0 : index
    %c0_46 = arith.constant 0 : index
    %103 = vector.load %arg14[%c0_45, %c0_46] : memref<1x32xf32, #tpu.memory_space<vmem>>, vector<1x32xf32>
    %104 = vector.broadcast %103 : vector<1x32xf32> to vector<8x32xf32>
    %105 = arith.addf %102, %104 : vector<8x32xf32>
    %106 = arith.addf %56, %105 : vector<8x32xf32>
    %c0_47 = arith.constant 0 : index
    %c0_48 = arith.constant 0 : index
    %c0_49 = arith.constant 0 : index
    %107 = vector.load %arg15[%c0_47, %c0_48, %c0_49] : memref<1x8x32xf32, #tpu.memory_space<vmem>>, vector<1x8x32xf32>
    %108 = vector.shape_cast %107 : vector<1x8x32xf32> to vector<8x32xf32>
    %109 = vector.shape_cast %106 : vector<8x32xf32> to vector<1x8x32xf32>
    tpu.vector_store %arg15[%c0_47, %c0_48, %c0_49], %109 {strides = array<i32>} : memref<1x8x32xf32, #tpu.memory_space<vmem>>, vector<1x8x32xf32>,
    return
  }
  func.func @transform_0(%arg0: i32, %arg1: i32) -> (i32, i32, i32) {
    %c0_i32 = arith.constant 0 : i32
    %c0_i32_0 = arith.constant 0 : i32
    %c0_i32_1 = arith.constant 0 : i32
    return %arg0, %c0_i32, %c0_i32_0 : i32, i32, i32
  }
  func.func @transform_1(%arg0: i32, %arg1: i32) -> (i32, i32) {
    %c0_i32 = arith.constant 0 : i32
    %c0_i32_0 = arith.constant 0 : i32
    %c0_i32_1 = arith.constant 0 : i32
    return %c0_i32, %c0_i32_0 : i32, i32
  }
  func.func @transform_2(%arg0: i32, %arg1: i32) -> (i32, i32) {
    %c0_i32 = arith.constant 0 : i32
    %c0_i32_0 = arith.constant 0 : i32
    %c0_i32_1 = arith.constant 0 : i32
    return %c0_i32, %c0_i32_0 : i32, i32
  }
  func.func @transform_3(%arg0: i32, %arg1: i32) -> (i32, i32) {
    %c0_i32 = arith.constant 0 : i32
    %c0_i32_0 = arith.constant 0 : i32
    %c0_i32_1 = arith.constant 0 : i32
    return %c0_i32, %c0_i32_0 : i32, i32
  }
  func.func @transform_4(%arg0: i32, %arg1: i32) -> (i32, i32) {
    %c0_i32 = arith.constant 0 : i32
    %c0_i32_0 = arith.constant 0 : i32
    %c0_i32_1 = arith.constant 0 : i32
    return %c0_i32, %c0_i32_0 : i32, i32
  }
  func.func @transform_5(%arg0: i32, %arg1: i32) -> (i32, i32, i32) {
    %c0_i32 = arith.constant 0 : i32
    %c0_i32_0 = arith.constant 0 : i32
    %c0_i32_1 = arith.constant 0 : i32
    %c0_i32_2 = arith.constant 0 : i32
    return %c0_i32, %c0_i32_0, %c0_i32_1 : i32, i32, i32
  }
  func.func @transform_6(%arg0: i32, %arg1: i32) -> (i32, i32) {
    %c0_i32 = arith.constant 0 : i32
    %c0_i32_0 = arith.constant 0 : i32
    %c0_i32_1 = arith.constant 0 : i32
    return %c0_i32, %c0_i32_0 : i32, i32
  }
  func.func @transform_7(%arg0: i32, %arg1: i32) -> (i32, i32) {
    %c0_i32 = arith.constant 0 : i32
    %c0_i32_0 = arith.constant 0 : i32
    %c0_i32_1 = arith.constant 0 : i32
    return %c0_i32, %c0_i32_0 : i32, i32
  }
  func.func @transform_8(%arg0: i32, %arg1: i32) -> (i32, i32) {
    %c0_i32 = arith.constant 0 : i32
    %c0_i32_0 = arith.constant 0 : i32
    %c0_i32_1 = arith.constant 0 : i32
    return %c0_i32, %c0_i32_0 : i32, i32
  }
  func.func @transform_9(%arg0: i32, %arg1: i32) -> (i32, i32) {
    %c0_i32 = arith.constant 0 : i32
    %c0_i32_0 = arith.constant 0 : i32
    %c0_i32_1 = arith.constant 0 : i32
    return %c0_i32, %c0_i32_0 : i32, i32
  }
  func.func @transform_10(%arg0: i32, %arg1: i32) -> (i32, i32) {
    %c0_i32 = arith.constant 0 : i32
    %c0_i32_0 = arith.constant 0 : i32
    %c0_i32_1 = arith.constant 0 : i32
    return %c0_i32, %c0_i32_0 : i32, i32
  }
  func.func @transform_11(%arg0: i32, %arg1: i32) -> (i32, i32) {
    %c0_i32 = arith.constant 0 : i32
    %c0_i32_0 = arith.constant 0 : i32
    %c0_i32_1 = arith.constant 0 : i32
    return %c0_i32, %c0_i32_0 : i32, i32
  }
  func.func @transform_12(%arg0: i32, %arg1: i32) -> (i32, i32) {
    %c0_i32 = arith.constant 0 : i32
    %c0_i32_0 = arith.constant 0 : i32
    %c0_i32_1 = arith.constant 0 : i32
    return %c0_i32, %c0_i32_0 : i32, i32
  }
  func.func @transform_13(%arg0: i32, %arg1: i32) -> (i32, i32, i32) {
    %c0_i32 = arith.constant 0 : i32
    %c0_i32_0 = arith.constant 0 : i32
    return %arg0, %arg1, %c0_i32 : i32, i32, i32
  }
}

</mosaic_0001>

<llo_original>
// kernel: tpu_custom_call.1
$region0: #{tpu_custom_call.1}
  #allocation0 [shape = 'u32[]', space=smem, size = 0x4, offset = 0x4, fixed_abs, tag = 'smem constant byte address 0x4 - core index']
  #allocation1 [shape = 'u32[144,128]{1,0:T(1,128)}', space=vmem, size = 0x12000, scoped, tag = 'internal scratch']
  #allocation2 [shape = 'bf16[4,8,8]{2,1,0:T(8,128)(2,1)}', space=vmem, size = 0x2000, scoped, tag = 'scratch operand']
  #allocation3 [shape = 'bf16[4,8,8]{2,1,0:T(8,128)(2,1)}', space=vmem, size = 0x2000, scoped, tag = 'scratch operand']
  #allocation4 [shape = 'bf16[4,8,8]{2,1,0:T(8,128)(2,1)}', space=vmem, size = 0x2000, scoped, tag = 'scratch operand']
  %s0 = inlined_call_operand.vmem [shape: f32[2,8,32], index: 0, kind: input, shape index: {}]
  %s1 = inlined_call_operand.vmem [shape: f32[1,32], index: 1, kind: input, shape index: {}]
  %s2 = inlined_call_operand.vmem [shape: f32[1,32], index: 2, kind: input, shape index: {}]
  %s3 = inlined_call_operand.vmem [shape: bf16[32,96], index: 3, kind: input, shape index: {}]
  %s4 = inlined_call_operand.vmem [shape: f32[1,96], index: 4, kind: input, shape index: {}]
  %s5 = inlined_call_operand.vmem [shape: bf16[4,8,32], index: 5, kind: input, shape index: {}]
  %s6 = inlined_call_operand.vmem [shape: f32[1,32], index: 6, kind: input, shape index: {}]
  %s7 = inlined_call_operand.vmem [shape: f32[1,32], index: 7, kind: input, shape index: {}]
  %s8 = inlined_call_operand.vmem [shape: f32[1,32], index: 8, kind: input, shape index: {}]
  %s9 = inlined_call_operand.vmem [shape: bf16[32,128], index: 9, kind: input, shape index: {}]
  %s10 = inlined_call_operand.vmem [shape: f32[1,128], index: 10, kind: input, shape index: {}]
  %s11 = inlined_call_operand.vmem [shape: bf16[128,32], index: 11, kind: input, shape index: {}]
  %s12 = inlined_call_operand.vmem [shape: f32[1,32], index: 12, kind: input, shape index: {}]
  %s13 = inlined_call_operand.hbm [shape: f32[2,8,32], index: 13, kind: output, shape index: {}]
  %s14 = sld [smem:[#allocation0]]
  $region96: #{tpu_custom_call.1} parent=0
    _
  %s16 = ssub.s32 1, %s14
  %s17 = scalar_select 0, %s16, %s14
  $region1: #{tpu_custom_call.1} parent=0
    #allocation5 [shape = 'u8[8192]{0}', space=vmem, size = 0x2000, scoped, tag = 'output window, operand 0']
    #allocation6 [shape = 's32[2]{0}', space=sflag, size = 0x8, scoped, tag = 'scoped memory for tpu_custom_call.1']
    %18 = vsyncpa [#allocation6], 0
    %s19 = scalar_lea.sflag [#allocation6], 1
    %20 = vsyncpa %s19, 0
    loop: start=0, step=1, limit=4
    $region2: #{tpu_custom_call.1} parent=1 // loop_pre_header
      _
    $region3: #{tpu_custom_call.1} parent=1 // loop_header
      %s22 = sphi 0, %s26
      %p23 = scmp.ge.s32.totalorder %s22, 4
      %s29 = sphi 0, %s41
      %s30 = sphi 0, %s37
      %s31 = sphi 0, %s29
      %s32 = sphi 0, %s30
      %s33 = sphi 0, %s31
      %s34 = sphi 0, %s32
      %s44 = sphi 0, %s46
      %s47 = sphi 0, %s44
      %s48 = sphi 0, %s47
      %s64 = sphi 0, %s48
      %s68 = sphi 0, %s68
      %s70 = sphi 0, %s68
      %s71 = sphi 0, %s70
      %s85 = sphi 0, %s71
      %s89 = sphi 0, %s89
      %s91 = sphi 0, %s89
      %s92 = sphi 0, %s91
      %s106 = sphi 0, %s92
      %s110 = sphi 0, %s110
      %s112 = sphi 0, %s110
      %s113 = sphi 0, %s112
      %s127 = sphi 0, %s113
      %s131 = sphi 0, %s131
      %s133 = sphi 0, %s131
      %s134 = sphi 0, %s133
      %s148 = sphi 0, %s134
      %s152 = sphi 0, %s152
      %s154 = sphi 0, %s152
      %s155 = sphi 0, %s154
      %s169 = sphi 0, %s155
      %s173 = sphi 0, %s173
      %s175 = sphi 0, %s173
      %s176 = sphi 0, %s175
      %s190 = sphi 0, %s176
      %s194 = sphi 0, %s194
      %s196 = sphi 0, %s194
      %s197 = sphi 0, %s196
      %s211 = sphi 0, %s197
      %s215 = sphi 0, %s215
      %s217 = sphi 0, %s215
      %s218 = sphi 0, %s217
      %s232 = sphi 0, %s218
      %s236 = sphi 0, %s236
      %s238 = sphi 0, %s236
      %s239 = sphi 0, %s238
      %s253 = sphi 0, %s239
      %s257 = sphi 0, %s257
      %s259 = sphi 0, %s257
      %s260 = sphi 0, %s259
      %s274 = sphi 0, %s260
      %s278 = sphi 0, %s278
      %s280 = sphi 0, %s278
      %s281 = sphi 0, %s280
      %s295 = sphi 0, %s281
      %s299 = sphi 0, %s299
      %s301 = sphi 0, %s299
      %s302 = sphi 0, %s301
      %s316 = sphi 0, %s302
      %s324 = sphi 0, %s326
      %s327 = sphi 0, %s324
      %s328 = sphi 0, %s327
      %s344 = sphi 0, %s328
    $region4: #{tpu_custom_call.1} parent=1 // loop_header_branch
      %25 = sbr.rel (%p23) target = $region8
    $region5: #{tpu_custom_call.1} parent=1 // loop_body
      %s27 = ssub.s32 %s22, 1
      %s28 = ssub.s32 %s22, 2
      %s35 = sadd.s32 1, %s30
      %p36 = scmp.ge.s32.totalorder %s35, 1
      %s37 = scalar_select %p36, 0, %s35
      %s38 = sadd.s32 1, %s29
      %s39 = scalar_select %p36, %s38, %s29
      %p40 = scmp.ge.s32.totalorder %s39, 2
      %s41 = scalar_select %p40, 0, %s39
      %s42 = ssub.s32 %s29, %s41
      %p43 = scmp.eq.s32.totalorder %s42, 0
      %s45 = sadd.s32 %s44, 1
      %s46 = scalar_select %p43, %s44, %s45
      %p49 = pneg %p43
      %p50 = scmp.eq.s32.totalorder %s22, 1
      %p51 = por %p49, %p50
      %p52 = scmp.ne.s32.totalorder %s44, %s47
      %p53 = scmp.eq.s32.totalorder %s22, 0
      %p54 = por %p52, %p53
      %p55 = scmp.ne.s32.totalorder %s44, %s47
      %p56 = scmp.eq.s32.totalorder %s27, 1
      %p57 = por %p55, %p56
      %p58 = scmp.ne.s32.totalorder %s47, %s48
      %p59 = scmp.eq.s32.totalorder %s27, 0
      %p60 = por %p58, %p59
      %p61 = scmp.ne.s32.totalorder %s47, %s48
      %p62 = scmp.eq.s32.totalorder %s28, 1
      %p63 = por %p61, %p62
      %p65 = scmp.ne.s32.totalorder %s48, %s64
      %p66 = scmp.eq.s32.totalorder %s28, 0
      %p67 = por %p65, %p66
      %s69 = sadd.s32 %s68, 1
      %p72 = scmp.eq.s32.totalorder %s22, 1
      %p73 = scmp.ne.s32.totalorder %s68, %s70
      %p74 = scmp.eq.s32.totalorder %s22, 0
      %p75 = por %p73, %p74
      %p76 = scmp.ne.s32.totalorder %s68, %s70
      %p77 = scmp.eq.s32.totalorder %s27, 1
      %p78 = por %p76, %p77
      %p79 = scmp.ne.s32.totalorder %s70, %s71
      %p80 = scmp.eq.s32.totalorder %s27, 0
      %p81 = por %p79, %p80
      %p82 = scmp.ne.s32.totalorder %s70, %s71
      %p83 = scmp.eq.s32.totalorder %s28, 1
      %p84 = por %p82, %p83
      %p86 = scmp.ne.s32.totalorder %s71, %s85
      %p87 = scmp.eq.s32.totalorder %s28, 0
      %p88 = por %p86, %p87
      %s90 = sadd.s32 %s89, 1
      %p93 = scmp.eq.s32.totalorder %s22, 1
      %p94 = scmp.ne.s32.totalorder %s89, %s91
      %p95 = scmp.eq.s32.totalorder %s22, 0
      %p96 = por %p94, %p95
      %p97 = scmp.ne.s32.totalorder %s89, %s91
      %p98 = scmp.eq.s32.totalorder %s27, 1
      %p99 = por %p97, %p98
      %p100 = scmp.ne.s32.totalorder %s91, %s92
      %p101 = scmp.eq.s32.totalorder %s27, 0
      %p102 = por %p100, %p101
      %p103 = scmp.ne.s32.totalorder %s91, %s92
      %p104 = scmp.eq.s32.totalorder %s28, 1
      %p105 = por %p103, %p104
      %p107 = scmp.ne.s32.totalorder %s92, %s106
      %p108 = scmp.eq.s32.totalorder %s28, 0
      %p109 = por %p107, %p108
      %s111 = sadd.s32 %s110, 1
      %p114 = scmp.eq.s32.totalorder %s22, 1
      %p115 = scmp.ne.s32.totalorder %s110, %s112
      %p116 = scmp.eq.s32.totalorder %s22, 0
      %p117 = por %p115, %p116
      %p118 = scmp.ne.s32.totalorder %s110, %s112
      %p119 = scmp.eq.s32.totalorder %s27, 1
      %p120 = por %p118, %p119
      %p121 = scmp.ne.s32.totalorder %s112, %s113
      %p122 = scmp.eq.s32.totalorder %s27, 0
      %p123 = por %p121, %p122
      %p124 = scmp.ne.s32.totalorder %s112, %s113
      %p125 = scmp.eq.s32.totalorder %s28, 1
      %p126 = por %p124, %p125
      %p128 = scmp.ne.s32.totalorder %s113, %s127
      %p129 = scmp.eq.s32.totalorder %s28, 0
      %p130 = por %p128, %p129
      %s132 = sadd.s32 %s131, 1
      %p135 = scmp.eq.s32.totalorder %s22, 1
      %p136 = scmp.ne.s32.totalorder %s131, %s133
      %p137 = scmp.eq.s32.totalorder %s22, 0
      %p138 = por %p136, %p137
      %p139 = scmp.ne.s32.totalorder %s131, %s133
      %p140 = scmp.eq.s32.totalorder %s27, 1
      %p141 = por %p139, %p140
      %p142 = scmp.ne.s32.totalorder %s133, %s134
      %p143 = scmp.eq.s32.totalorder %s27, 0
      %p144 = por %p142, %p143
      %p145 = scmp.ne.s32.totalorder %s133, %s134
      %p146 = scmp.eq.s32.totalorder %s28, 1
      %p147 = por %p145, %p146
      %p149 = scmp.ne.s32.totalorder %s134, %s148
      %p150 = scmp.eq.s32.totalorder %s28, 0
      %p151 = por %p149, %p150
      %s153 = sadd.s32 %s152, 1
      %p156 = scmp.eq.s32.totalorder %s22, 1
      %p157 = scmp.ne.s32.totalorder %s152, %s154
      %p158 = scmp.eq.s32.totalorder %s22, 0
      %p159 = por %p157, %p158
      %p160 = scmp.ne.s32.totalorder %s152, %s154
      %p161 = scmp.eq.s32.totalorder %s27, 1
      %p162 = por %p160, %p161
      %p163 = scmp.ne.s32.totalorder %s154, %s155
      %p164 = scmp.eq.s32.totalorder %s27, 0
      %p165 = por %p163, %p164
      %p166 = scmp.ne.s32.totalorder %s154, %s155
      %p167 = scmp.eq.s32.totalorder %s28, 1
      %p168 = por %p166, %p167
      %p170 = scmp.ne.s32.totalorder %s155, %s169
      %p171 = scmp.eq.s32.totalorder %s28, 0
      %p172 = por %p170, %p171
      %s174 = sadd.s32 %s173, 1
      %p177 = scmp.eq.s32.totalorder %s22, 1
      %p178 = scmp.ne.s32.totalorder %s173, %s175
      %p179 = scmp.eq.s32.totalorder %s22, 0
      %p180 = por %p178, %p179
      %p181 = scmp.ne.s32.totalorder %s173, %s175
      %p182 = scmp.eq.s32.totalorder %s27, 1
      %p183 = por %p181, %p182
      %p184 = scmp.ne.s32.totalorder %s175, %s176
      %p185 = scmp.eq.s32.totalorder %s27, 0
      %p186 = por %p184, %p185
      %p187 = scmp.ne.s32.totalorder %s175, %s176
      %p188 = scmp.eq.s32.totalorder %s28, 1
      %p189 = por %p187, %p188
      %p191 = scmp.ne.s32.totalorder %s176, %s190
      %p192 = scmp.eq.s32.totalorder %s28, 0
      %p193 = por %p191, %p192
      %s195 = sadd.s32 %s194, 1
      %p198 = scmp.eq.s32.totalorder %s22, 1
      %p199 = scmp.ne.s32.totalorder %s194, %s196
      %p200 = scmp.eq.s32.totalorder %s22, 0
      %p201 = por %p199, %p200
      %p202 = scmp.ne.s32.totalorder %s194, %s196
      %p203 = scmp.eq.s32.totalorder %s27, 1
      %p204 = por %p202, %p203
      %p205 = scmp.ne.s32.totalorder %s196, %s197
      %p206 = scmp.eq.s32.totalorder %s27, 0
      %p207 = por %p205, %p206
      %p208 = scmp.ne.s32.totalorder %s196, %s197
      %p209 = scmp.eq.s32.totalorder %s28, 1
      %p210 = por %p208, %p209
      %p212 = scmp.ne.s32.totalorder %s197, %s211
      %p213 = scmp.eq.s32.totalorder %s28, 0
      %p214 = por %p212, %p213
      %s216 = sadd.s32 %s215, 1
      %p219 = scmp.eq.s32.totalorder %s22, 1
      %p220 = scmp.ne.s32.totalorder %s215, %s217
      %p221 = scmp.eq.s32.totalorder %s22, 0
      %p222 = por %p220, %p221
      %p223 = scmp.ne.s32.totalorder %s215, %s217
      %p224 = scmp.eq.s32.totalorder %s27, 1
      %p225 = por %p223, %p224
      %p226 = scmp.ne.s32.totalorder %s217, %s218
      %p227 = scmp.eq.s32.totalorder %s27, 0
      %p228 = por %p226, %p227
      %p229 = scmp.ne.s32.totalorder %s217, %s218
      %p230 = scmp.eq.s32.totalorder %s28, 1
      %p231 = por %p229, %p230
      %p233 = scmp.ne.s32.totalorder %s218, %s232
      %p234 = scmp.eq.s32.totalorder %s28, 0
      %p235 = por %p233, %p234
      %s237 = sadd.s32 %s236, 1
      %p240 = scmp.eq.s32.totalorder %s22, 1
      %p241 = scmp.ne.s32.totalorder %s236, %s238
      %p242 = scmp.eq.s32.totalorder %s22, 0
      %p243 = por %p241, %p242
      %p244 = scmp.ne.s32.totalorder %s236, %s238
      %p245 = scmp.eq.s32.totalorder %s27, 1
      %p246 = por %p244, %p245
      %p247 = scmp.ne.s32.totalorder %s238, %s239
      %p248 = scmp.eq.s32.totalorder %s27, 0
      %p249 = por %p247, %p248
      %p250 = scmp.ne.s32.totalorder %s238, %s239
      %p251 = scmp.eq.s32.totalorder %s28, 1
      %p252 = por %p250, %p251
      %p254 = scmp.ne.s32.totalorder %s239, %s253
      %p255 = scmp.eq.s32.totalorder %s28, 0
      %p256 = por %p254, %p255
      %s258 = sadd.s32 %s257, 1
      %p261 = scmp.eq.s32.totalorder %s22, 1
      %p262 = scmp.ne.s32.totalorder %s257, %s259
      %p263 = scmp.eq.s32.totalorder %s22, 0
      %p264 = por %p262, %p263
      %p265 = scmp.ne.s32.totalorder %s257, %s259
      %p266 = scmp.eq.s32.totalorder %s27, 1
      %p267 = por %p265, %p266
      %p268 = scmp.ne.s32.totalorder %s259, %s260
      %p269 = scmp.eq.s32.totalorder %s27, 0
      %p270 = por %p268, %p269
      %p271 = scmp.ne.s32.totalorder %s259, %s260
      %p272 = scmp.eq.s32.totalorder %s28, 1
      %p273 = por %p271, %p272
      %p275 = scmp.ne.s32.totalorder %s260, %s274
      %p276 = scmp.eq.s32.totalorder %s28, 0
      %p277 = por %p275, %p276
      %s279 = sadd.s32 %s278, 1
      %p282 = scmp.eq.s32.totalorder %s22, 1
      %p283 = scmp.ne.s32.totalorder %s278, %s280
      %p284 = scmp.eq.s32.totalorder %s22, 0
      %p285 = por %p283, %p284
      %p286 = scmp.ne.s32.totalorder %s278, %s280
      %p287 = scmp.eq.s32.totalorder %s27, 1
      %p288 = por %p286, %p287
      %p289 = scmp.ne.s32.totalorder %s280, %s281
      %p290 = scmp.eq.s32.totalorder %s27, 0
      %p291 = por %p289, %p290
      %p292 = scmp.ne.s32.totalorder %s280, %s281
      %p293 = scmp.eq.s32.totalorder %s28, 1
      %p294 = por %p292, %p293
      %p296 = scmp.ne.s32.totalorder %s281, %s295
      %p297 = scmp.eq.s32.totalorder %s28, 0
      %p298 = por %p296, %p297
      %s300 = sadd.s32 %s299, 1
      %p303 = scmp.eq.s32.totalorder %s22, 1
      %p304 = scmp.ne.s32.totalorder %s299, %s301
      %p305 = scmp.eq.s32.totalorder %s22, 0
      %p306 = por %p304, %p305
      %p307 = scmp.ne.s32.totalorder %s299, %s301
      %p308 = scmp.eq.s32.totalorder %s27, 1
      %p309 = por %p307, %p308
      %p310 = scmp.ne.s32.totalorder %s301, %s302
      %p311 = scmp.eq.s32.totalorder %s27, 0
      %p312 = por %p310, %p311
      %p313 = scmp.ne.s32.totalorder %s301, %s302
      %p314 = scmp.eq.s32.totalorder %s28, 1
      %p315 = por %p313, %p314
      %p317 = scmp.ne.s32.totalorder %s302, %s316
      %p318 = scmp.eq.s32.totalorder %s28, 0
      %p319 = por %p317, %p318
      %s320 = ssub.s32 %s29, %s41
      %s321 = ssub.s32 %s30, %s37
      %s322 = sor.u32 %s320, %s321
      %p323 = scmp.eq.s32.totalorder %s322, 0
      %s325 = sadd.s32 %s324, 1
      %s326 = scalar_select %p323, %s324, %s325
      %p329 = pneg %p323
      %p330 = scmp.eq.s32.totalorder %s22, 1
      %p331 = por %p329, %p330
      %p332 = scmp.ne.s32.totalorder %s324, %s327
      %p333 = scmp.eq.s32.totalorder %s22, 0
      %p334 = por %p332, %p333
      %p335 = scmp.ne.s32.totalorder %s324, %s327
      %p336 = scmp.eq.s32.totalorder %s27, 1
      %p337 = por %p335, %p336
      %p338 = scmp.ne.s32.totalorder %s327, %s328
      %p339 = scmp.eq.s32.totalorder %s27, 0
      %p340 = por %p338, %p339
      %p341 = scmp.ne.s32.totalorder %s327, %s328
      %p342 = scmp.eq.s32.totalorder %s28, 1
      %p343 = por %p341, %p342
      %p345 = scmp.ne.s32.totalorder %s328, %s344
      %p346 = scmp.eq.s32.totalorder %s28, 0
      %p347 = por %p345, %p346
      %p348 = scmp.le.s32.totalorder 1, %s22
      %p349 = scmp.lt.s32.totalorder %s22, 3
      %p350 = pnand %p348, %p349
      %p351 = pneg %p350
      // Predicated region
      $region9: #{tpu_custom_call.1} parent=5 // pred_check
        _
      $region10: #{tpu_custom_call.1} parent=5 // pred_check_branch
        %353 = sbr.rel (%p350) target = $region12
      $region11: #{tpu_custom_call.1} parent=5 // pred_region
        %s354 = ssub.s32 %s22, 1
        // Predicated region
        $region13: #{tpu_custom_call.1} parent=11 // pred_check
          %p355 = pneg %p81
        $region14: #{tpu_custom_call.1} parent=11 // pred_check_branch
          %357 = sbr.rel (%p355) target = $region16
        $region15: #{tpu_custom_call.1} parent=11 // pred_region
          _
        $region16: #{tpu_custom_call.1} parent=11 // pred_fallthru
          _
        // Predicated region
        $region17: #{tpu_custom_call.1} parent=11 // pred_check
          %p358 = pneg %p102
        $region18: #{tpu_custom_call.1} parent=11 // pred_check_branch
          %360 = sbr.rel (%p358) target = $region20
        $region19: #{tpu_custom_call.1} parent=11 // pred_region
          _
        $region20: #{tpu_custom_call.1} parent=11 // pred_fallthru
          _
        // Predicated region
        $region21: #{tpu_custom_call.1} parent=11 // pred_check
          %p361 = pneg %p123
        $region22: #{tpu_custom_call.1} parent=11 // pred_check_branch
          %363 = sbr.rel (%p361) target = $region24
        $region23: #{tpu_custom_call.1} parent=11 // pred_region
          _
        $region24: #{tpu_custom_call.1} parent=11 // pred_fallthru
          _
        // Predicated region
        $region25: #{tpu_custom_call.1} parent=11 // pred_check
          %p364 = pneg %p144
        $region26: #{tpu_custom_call.1} parent=11 // pred_check_branch
          %366 = sbr.rel (%p364) target = $region28
        $region27: #{tpu_custom_call.1} parent=11 // pred_region
          _
        $region28: #{tpu_custom_call.1} parent=11 // pred_fallthru
          _
        // Predicated region
        $region29: #{tpu_custom_call.1} parent=11 // pred_check
          %p367 = pneg %p165
        $region30: #{tpu_custom_call.1} parent=11 // pred_check_branch
          %369 = sbr.rel (%p367) target = $region32
        $region31: #{tpu_custom_call.1} parent=11 // pred_region
          _
        $region32: #{tpu_custom_call.1} parent=11 // pred_fallthru
          _
        // Predicated region
        $region33: #{tpu_custom_call.1} parent=11 // pred_check
          %p370 = pneg %p186
        $region34: #{tpu_custom_call.1} parent=11 // pred_check_branch
          %372 = sbr.rel (%p370) target = $region36
        $region35: #{tpu_custom_call.1} parent=11 // pred_region
          _
        $region36: #{tpu_custom_call.1} parent=11 // pred_fallthru
          _
        // Predicated region
        $region37: #{tpu_custom_call.1} parent=11 // pred_check
          %p373 = pneg %p207
        $region38: #{tpu_custom_call.1} parent=11 // pred_check_branch
          %375 = sbr.rel (%p373) target = $region40
        $region39: #{tpu_custom_call.1} parent=11 // pred_region
          _
        $region40: #{tpu_custom_call.1} parent=11 // pred_fallthru
          _
        // Predicated region
        $region41: #{tpu_custom_call.1} parent=11 // pred_check
          %p376 = pneg %p228
        $region42: #{tpu_custom_call.1} parent=11 // pred_check_branch
          %378 = sbr.rel (%p376) target = $region44
        $region43: #{tpu_custom_call.1} parent=11 // pred_region
          _
        $region44: #{tpu_custom_call.1} parent=11 // pred_fallthru
          _
        // Predicated region
        $region45: #{tpu_custom_call.1} parent=11 // pred_check
          %p379 = pneg %p249
        $region46: #{tpu_custom_call.1} parent=11 // pred_check_branch
          %381 = sbr.rel (%p379) target = $region48
        $region47: #{tpu_custom_call.1} parent=11 // pred_region
          _
        $region48: #{tpu_custom_call.1} parent=11 // pred_fallthru
          _
        // Predicated region
        $region49: #{tpu_custom_call.1} parent=11 // pred_check
          %p382 = pneg %p270
        $region50: #{tpu_custom_call.1} parent=11 // pred_check_branch
          %384 = sbr.rel (%p382) target = $region52
        $region51: #{tpu_custom_call.1} parent=11 // pred_region
          _
        $region52: #{tpu_custom_call.1} parent=11 // pred_fallthru
          _
        // Predicated region
        $region53: #{tpu_custom_call.1} parent=11 // pred_check
          %p385 = pneg %p291
        $region54: #{tpu_custom_call.1} parent=11 // pred_check_branch
          %387 = sbr.rel (%p385) target = $region56
        $region55: #{tpu_custom_call.1} parent=11 // pred_region
          _
        $region56: #{tpu_custom_call.1} parent=11 // pred_fallthru
          _
        // Predicated region
        $region57: #{tpu_custom_call.1} parent=11 // pred_check
          %p388 = pneg %p312
        $region58: #{tpu_custom_call.1} parent=11 // pred_check_branch
          %390 = sbr.rel (%p388) target = $region60
        $region59: #{tpu_custom_call.1} parent=11 // pred_region
          _
        $region60: #{tpu_custom_call.1} parent=11 // pred_fallthru
          _
      $region12: #{tpu_custom_call.1} parent=5 // pred_fallthru
        _
      %p391 = scmp.lt.s32.totalorder %s22, 2
      // Predicated region
      $region61: #{tpu_custom_call.1} parent=5 // pred_check
        %p392 = pneg %p391
      $region62: #{tpu_custom_call.1} parent=5 // pred_check_branch
        %394 = sbr.rel (%p392) target = $region64
      $region63: #{tpu_custom_call.1} parent=5 // pred_region
        // Predicated region
        $region65: #{tpu_custom_call.1} parent=63 // pred_check
          %p395 = pneg %p54
        $region66: #{tpu_custom_call.1} parent=63 // pred_check_branch
          %397 = sbr.rel (%p395) target = $region68
        $region67: #{tpu_custom_call.1} parent=63 // pred_region
          %p398 = scmp.lt.s32.totalorder %s29, 1
          %s399 = scalar_select %p398, %s29, 1
          %s400 = smul.addr %s399, 8
          %s401 = scalar_lea.vmem %s0, %s400
        $region68: #{tpu_custom_call.1} parent=63 // pred_fallthru
          _
      $region64: #{tpu_custom_call.1} parent=5 // pred_fallthru
        _
      %p402 = scmp.le.s32.totalorder 1, %s22
      %p403 = scmp.lt.s32.totalorder %s22, 3
      %p404 = pnand %p402, %p403
      %p405 = pneg %p404
      // Predicated region
      $region69: #{tpu_custom_call.1} parent=5 // pred_check
        _
      $region70: #{tpu_custom_call.1} parent=5 // pred_check_branch
        %407 = sbr.rel (%p404) target = $region72
      $region71: #{tpu_custom_call.1} parent=5 // pred_region
        %s408 = ssub.s32 %s22, 1
        %p409 = scmp.lt.s32.totalorder %s31, 1
        %s410 = scalar_select %p409, %s31, 1
        %s411 = smul.addr %s410, 8
        %s412 = scalar_lea.vmem %s0, %s411
        %p413 = pneg %p60
        %p414 = pneg %p57
        %p415 = pneg %p81
        %p416 = pneg %p78
        %p417 = pneg %p102
        %p418 = pneg %p99
        %p419 = pneg %p123
        %p420 = pneg %p120
        %p421 = pneg %p144
        %p422 = pneg %p141
        %p423 = pneg %p165
        %p424 = pneg %p162
        %p425 = pneg %p186
        %p426 = pneg %p183
        %p427 = pneg %p207
        %p428 = pneg %p204
        %p429 = pneg %p228
        %p430 = pneg %p225
        %p431 = pneg %p249
        %p432 = pneg %p246
        %p433 = pneg %p270
        %p434 = pneg %p267
        %p435 = pneg %p291
        %p436 = pneg %p288
        %p437 = pneg %p312
        %p438 = pneg %p309
        %p439 = pneg %p340
        %p440 = pneg %p337
        %s441 = sand.u32 %s327, 1
        %s442 = scalar_lea.sflag [#allocation6], %s441
        %s443 = sand.u32 %s327, 1
        %s444 = smul.addr %s443, 8
        %s445 = scalar_lea.vmem [#allocation5], %s444
        %p446 = scmp.lt.s32.totalorder %s31, 1
        %s447 = scalar_select %p446, %s31, 1
        %s448 = smul.addr %s447, 8
        %s449 = scalar_lea.vmem %s0, %s448
        %s451 = smul.u32 %s32, 8
        %p452 = scmp.eq.s32.totalorder %s32, 0
        // Predicated region
        $region73: #{tpu_custom_call.1} parent=71 // pred_check
          %p453 = pneg %p452
        $region74: #{tpu_custom_call.1} parent=71 // pred_check_branch
          %455 = sbr.rel (%p453) target = $region76
        $region75: #{tpu_custom_call.1} parent=71 // pred_region
          %v456 = vld [vmem:[%s449] sm:$0xff]
          %v457 = vld [vmem:[%s1] sm:$0x1]
          %v458 = vld [vmem:[%s2] sm:$0x1]
          %vm459 = vcmask 261120
          %v460 = vsel %vm459, %v456, 0.0
          %461 = vadd.xlane.f32.xlu0 %v460
          %v462 = vpop.xlane.xlu0 %461
          %v463 = vrcp.pop 32.0
          %v464 = vmul.f32 %v462, %v463
          %v465 = vsub.f32 %v456, %v464
          %v466 = vmul.f32 %v465, %v465
          %v467 = vsel %vm459, %v466, 0.0
          %468 = vadd.xlane.f32.xlu0 %v467
          %v469 = vpop.xlane.xlu0 %468
          %v470 = vmul.f32 %v469, %v463
          %v471 = vadd.f32 %v470, 1e-05
          %v472 = vrsqrt.pop %v471
          %v473 = vmul.f32 %v465, %v472
          %v475 = vlaneseq
          %v476 = vshrl.u32 %v475, 7
          %v477 = vsub.s32 0, %v476
          %v478 = vrot.slane %v457, %v477
          %v480 = vmul.f32 %v473, %v478
          %v482 = vlaneseq
          %v483 = vshrl.u32 %v482, 7
          %v484 = vsub.s32 0, %v483
          %v485 = vrot.slane %v458, %v484
          %v487 = vadd.f32 %v480, %v485
          %v488 = vpack.c.bf16 %v487, %v487
          %v489 = vld [vmem:[%s3] sm:$0xf]
          %v490 = vld [vmem:[%s3 + $0x4] sm:$0xf]
          %v491 = vld [vmem:[%s3 + $0x8] sm:$0xf]
          %v492 = vld [vmem:[%s3 + $0xc] sm:$0xf]
          %v493 = vld [vmem:[%s4] sm:$0x1]
          %v495 = vlaneseq
          %v496 = vshrl.u32 %v495, 7
          %v497 = vsub.s32 0, %v496
          %v498 = vrot.slane %v493, %v497
          %v504 = vunpack.c.l.b16 %v489
          %v505 = vunpack.c.l.b16 %v490
          %v506 = vunpack.c.l.b16 %v491
          %v507 = vunpack.c.l.b16 %v492
          %v508 = vpack.c.b16 %v505, %v504
          %v509 = vpack.c.b16 %v507, %v506
          %v513 = vsel %vm459, %v488, 0
          %515 = vmatprep.subr.bf16.mxu0 0
          %516 = vmatpush1.bf16.msra.mxu0 %v508
          %517 = vmatprep.subr.bf16.mxu0 0
          %518 = vmatpush1.bf16.msra.mxu0 %v509
          %519 = vmatprep.subr.bf16.mxu0 0
          %520 = vmatpush1.bf16.msra.mxu0 0
          %521 = vmatprep.subr.bf16.mxu0 0
          %522 = vmatpush1.bf16.msra.mxu0 0
          %523 = vmatprep.subr.bf16.mxu0 0
          %524 = vmatpush1.bf16.msra.mxu0 0
          %525 = vmatprep.subr.bf16.mxu0 0
          %526 = vmatpush1.bf16.msra.mxu0 0
          %527 = vmatprep.subr.bf16.mxu0 0
          %528 = vmatpush1.bf16.msra.mxu0 0
          %529 = vmatprep.subr.bf16.mxu0 0
          %530 = vmatpush1.bf16.msra.mxu0 0
          %531 = vmatprep.subr.bf16.mxu0 0
          %532 = vmatpush1.bf16.msra.mxu0 0
          %533 = vmatprep.subr.bf16.mxu0 0
          %534 = vmatpush1.bf16.msra.mxu0 0
          %535 = vmatprep.subr.bf16.mxu0 0
          %536 = vmatpush1.bf16.msra.mxu0 0
          %537 = vmatprep.subr.bf16.mxu0 0
          %538 = vmatpush1.bf16.msra.mxu0 0
          %539 = vmatprep.subr.bf16.mxu0 0
          %540 = vmatpush1.bf16.msra.mxu0 0
          %541 = vmatprep.subr.bf16.mxu0 0
          %542 = vmatpush1.bf16.msra.mxu0 0
          %543 = vmatprep.subr.bf16.mxu0 0
          %544 = vmatpush1.bf16.msra.mxu0 0
          %545 = vmatprep.subr.bf16.mxu0 0
          %546 = vmatpush1.bf16.msra.mxu0 0
          %547 = vmatprep.mubr.bf16.mxu0 0
          %548 = vmatmul.mubr.bf16.gmra.mrb[0].mxu0 %v513
          %v549 = vpop.f32.mrb[0].mxu0
          %v550 = vadd.f32 %v498, %v549
          %v551 = vpop.f32.mrb[0].mxu0
          %v552 = vpop.f32.mrb[0].mxu0
          %v553 = vpop.f32.mrb[0].mxu0
          %554 = vdwg.mxu0
          %v555 = vpack.c.bf16 %v550, %v550
          %vm556 = vcmask 60416
          %557 = vst.msk [vmem:[#allocation2] sm:$0xf] %vm556, %v555
          %v559 = vunpack.c.l.b16 %v555
          %v560 = vpack.c.b16 %v559, %v559
          %561 = vrot.lane.b32.xlu0 %v560, 96
          %v562 = vpop.permute.xlu0 %561
          %564 = vst.msk [vmem:[#allocation3] sm:$0xf] %vm556, %v562
          %565 = vrot.lane.b32.xlu0 %v560, 64
          %v566 = vpop.permute.xlu0 %565
          %568 = vst.msk [vmem:[#allocation4] sm:$0xf] %vm556, %v566
          %569 = vrot.lane.b32.xlu0 %v560, 120
          %v570 = vpop.permute.xlu0 %569
          %s572 = scalar_lea.vmem [#allocation2], 4
          %573 = vst.msk [vmem:[%s572] sm:$0xf] %vm556, %v570
          %574 = vrot.lane.b32.xlu0 %v560, 88
          %v575 = vpop.permute.xlu0 %574
          %s577 = scalar_lea.vmem [#allocation3], 4
          %578 = vst.msk [vmem:[%s577] sm:$0xf] %vm556, %v575
          %579 = vrot.lane.b32.xlu0 %v560, 56
          %v580 = vpop.permute.xlu0 %579
          %s582 = scalar_lea.vmem [#allocation4], 4
          %583 = vst.msk [vmem:[%s582] sm:$0xf] %vm556, %v580
          %584 = vrot.lane.b32.xlu0 %v560, 112
          %v585 = vpop.permute.xlu0 %584
          %s587 = scalar_lea.vmem [#allocation2], 8
          %588 = vst.msk [vmem:[%s587] sm:$0xf] %vm556, %v585
          %589 = vrot.lane.b32.xlu0 %v560, 80
          %v590 = vpop.permute.xlu0 %589
          %s592 = scalar_lea.vmem [#allocation3], 8
          %593 = vst.msk [vmem:[%s592] sm:$0xf] %vm556, %v590
          %594 = vrot.lane.b32.xlu0 %v560, 48
          %v595 = vpop.permute.xlu0 %594
          %s597 = scalar_lea.vmem [#allocation4], 8
          %598 = vst.msk [vmem:[%s597] sm:$0xf] %vm556, %v595
          %599 = vrot.lane.b32.xlu0 %v560, 104
          %v600 = vpop.permute.xlu0 %599
          %s602 = scalar_lea.vmem [#allocation2], 12
          %603 = vst.msk [vmem:[%s602] sm:$0xf] %vm556, %v600
          %604 = vrot.lane.b32.xlu0 %v560, 72
          %v605 = vpop.permute.xlu0 %604
          %s607 = scalar_lea.vmem [#allocation3], 12
          %608 = vst.msk [vmem:[%s607] sm:$0xf] %vm556, %v605
          %609 = vrot.lane.b32.xlu0 %v560, 40
          %v610 = vpop.permute.xlu0 %609
          %s612 = scalar_lea.vmem [#allocation4], 12
          %613 = vst.msk [vmem:[%s612] sm:$0xf] %vm556, %v610
        $region76: #{tpu_custom_call.1} parent=71 // pred_fallthru
          _
        %s614 = sshra.s32 %s451, 3
        %s615 = sand.u32 %s451, 7
        %s616 = smul.addr %s614, 4
        %s617 = scalar_lea.vmem [#allocation2], %s616
        %v618 = vld [vmem:[%s617] sm:$0xf]
        %v619 = vld [vmem:[%s617 + $0x4] sm:$0xf]
        %v620 = vld [vmem:[%s617 + $0x8] sm:$0xf]
        %v621 = vld [vmem:[%s617 + $0xc] sm:$0xf]
        %v622 = vlaneseq
        %v623 = vshrl.u32 %v622, 7
        %v624 = vstv %s451
        %v625 = vadd.s32 %v624, %v623
        %v626 = vlaneseq
        %v627 = vand.u32 %v626, 127
        %s628 = sadd.s32 %s32, 1
        // While loop
        $region77: #{tpu_custom_call.1} parent=71 // loop_pre_header
          _
        $region78: #{tpu_custom_call.1} parent=71 // loop_header
          %s630 = sphi 0, %s632
          %p631 = scmp.ge.s32.totalorder %s630, %s628
          %v635 = vphi -1e+30, %v868
          %v636 = vphi -1e+30, %v869
          %v637 = vphi -1e+30, %v870
          %v638 = vphi -1e+30, %v871
          %v639 = vphi 0.0, %v912
          %v640 = vphi 0.0, %v913
          %v641 = vphi 0.0, %v914
          %v642 = vphi 0.0, %v915
          %v643 = vphi 0.0, %v1109
          %v644 = vphi 0.0, %v1110
          %v645 = vphi 0.0, %v1111
          %v646 = vphi 0.0, %v1112
        $region79: #{tpu_custom_call.1} parent=71 // loop_header_branch
          %634 = sbr.rel (%p631) target = $region83
        $region80: #{tpu_custom_call.1} parent=71 // loop_body
          %s647 = smul.u32 %s630, 8
          %s648 = sshra.s32 %s647, 3
          %s649 = sand.u32 %s647, 7
          %s650 = smul.addr %s648, 4
          %s651 = scalar_lea.vmem [#allocation3], %s650
          %v652 = vld [vmem:[%s651] sm:$0xf]
          %v653 = vld [vmem:[%s651 + $0x4] sm:$0xf]
          %v654 = vld [vmem:[%s651 + $0x8] sm:$0xf]
          %v655 = vld [vmem:[%s651 + $0xc] sm:$0xf]
          %s656 = smul.addr %s648, 4
          %s657 = scalar_lea.vmem [#allocation4], %s656
          %v658 = vld [vmem:[%s657] sm:$0xf]
          %v659 = vld [vmem:[%s657 + $0x4] sm:$0xf]
          %v660 = vld [vmem:[%s657 + $0x8] sm:$0xf]
          %v661 = vld [vmem:[%s657 + $0xc] sm:$0xf]
          %vm662 = vcmask 64512
          %v664 = vsel %vm662, %v618, 0
          %v667 = vsel %vm662, %v652, 0
          %669 = vmatprep.subr.bf16.mxu0 0
          %670 = vmatpush1.bf16.xpose.msra.mxu0 %v667
          %671 = vmatprep.subr.bf16.mxu0 0
          %672 = vmatpush1.bf16.xpose.msra.mxu0 0
          %673 = vmatprep.subr.bf16.mxu0 0
          %674 = vmatpush1.bf16.xpose.msra.mxu0 0
          %675 = vmatprep.subr.bf16.mxu0 0
          %676 = vmatpush1.bf16.xpose.msra.mxu0 0
          %677 = vmatprep.subr.bf16.mxu0 0
          %678 = vmatpush1.bf16.xpose.msra.mxu0 0
          %679 = vmatprep.subr.bf16.mxu0 0
          %680 = vmatpush1.bf16.xpose.msra.mxu0 0
          %681 = vmatprep.subr.bf16.mxu0 0
          %682 = vmatpush1.bf16.xpose.msra.mxu0 0
          %683 = vmatprep.subr.bf16.mxu0 0
          %684 = vmatpush1.bf16.xpose.msra.mxu0 0
          %685 = vmatprep.subr.bf16.mxu0 0
          %686 = vmatpush1.bf16.xpose.msra.mxu0 0
          %687 = vmatprep.subr.bf16.mxu0 0
          %688 = vmatpush1.bf16.xpose.msra.mxu0 0
          %689 = vmatprep.subr.bf16.mxu0 0
          %690 = vmatpush1.bf16.xpose.msra.mxu0 0
          %691 = vmatprep.subr.bf16.mxu0 0
          %692 = vmatpush1.bf16.xpose.msra.mxu0 0
          %693 = vmatprep.subr.bf16.mxu0 0
          %694 = vmatpush1.bf16.xpose.msra.mxu0 0
          %695 = vmatprep.subr.bf16.mxu0 0
          %696 = vmatpush1.bf16.xpose.msra.mxu0 0
          %697 = vmatprep.subr.bf16.mxu0 0
          %698 = vmatpush1.bf16.xpose.msra.mxu0 0
          %699 = vmatprep.subr.bf16.mxu0 0
          %700 = vmatpush1.bf16.xpose.msra.mxu0 0
          %701 = vmatprep.mubr.bf16.mxu0 0
          %702 = vmatmul.mubr.bf16.gmra.mrb[0].mxu0 %v664
          %v703 = vpop.f32.mrb[0].mxu0
          %v704 = vadd.f32 0.0, %v703
          %v705 = vpop.f32.mrb[0].mxu0
          %v706 = vpop.f32.mrb[0].mxu0
          %v707 = vpop.f32.mrb[0].mxu0
          %708 = vdwg.mxu0
          %v710 = vsel %vm662, %v619, 0
          %v713 = vsel %vm662, %v653, 0
          %715 = vmatprep.subr.bf16.mxu0 0
          %716 = vmatpush1.bf16.xpose.msra.mxu0 %v713
          %717 = vmatprep.subr.bf16.mxu0 0
          %718 = vmatpush1.bf16.xpose.msra.mxu0 0
          %719 = vmatprep.subr.bf16.mxu0 0
          %720 = vmatpush1.bf16.xpose.msra.mxu0 0
          %721 = vmatprep.subr.bf16.mxu0 0
          %722 = vmatpush1.bf16.xpose.msra.mxu0 0
          %723 = vmatprep.subr.bf16.mxu0 0
          %724 = vmatpush1.bf16.xpose.msra.mxu0 0
          %725 = vmatprep.subr.bf16.mxu0 0
          %726 = vmatpush1.bf16.xpose.msra.mxu0 0
          %727 = vmatprep.subr.bf16.mxu0 0
          %728 = vmatpush1.bf16.xpose.msra.mxu0 0
          %729 = vmatprep.subr.bf16.mxu0 0
          %730 = vmatpush1.bf16.xpose.msra.mxu0 0
          %731 = vmatprep.subr.bf16.mxu0 0
          %732 = vmatpush1.bf16.xpose.msra.mxu0 0
          %733 = vmatprep.subr.bf16.mxu0 0
          %734 = vmatpush1.bf16.xpose.msra.mxu0 0
          %735 = vmatprep.subr.bf16.mxu0 0
          %736 = vmatpush1.bf16.xpose.msra.mxu0 0
          %737 = vmatprep.subr.bf16.mxu0 0
          %738 = vmatpush1.bf16.xpose.msra.mxu0 0
          %739 = vmatprep.subr.bf16.mxu0 0
          %740 = vmatpush1.bf16.xpose.msra.mxu0 0
          %741 = vmatprep.subr.bf16.mxu0 0
          %742 = vmatpush1.bf16.xpose.msra.mxu0 0
          %743 = vmatprep.subr.bf16.mxu0 0
          %744 = vmatpush1.bf16.xpose.msra.mxu0 0
          %745 = vmatprep.subr.bf16.mxu0 0
          %746 = vmatpush1.bf16.xpose.msra.mxu0 0
          %747 = vmatprep.mubr.bf16.mxu0 0
          %748 = vmatmul.mubr.bf16.gmra.mrb[0].mxu0 %v710
          %v749 = vpop.f32.mrb[0].mxu0
          %v750 = vadd.f32 0.0, %v749
          %v751 = vpop.f32.mrb[0].mxu0
          %v752 = vpop.f32.mrb[0].mxu0
          %v753 = vpop.f32.mrb[0].mxu0
          %754 = vdwg.mxu0
          %v756 = vsel %vm662, %v620, 0
          %v759 = vsel %vm662, %v654, 0
          %761 = vmatprep.subr.bf16.mxu0 0
          %762 = vmatpush1.bf16.xpose.msra.mxu0 %v759
          %763 = vmatprep.subr.bf16.mxu0 0
          %764 = vmatpush1.bf16.xpose.msra.mxu0 0
          %765 = vmatprep.subr.bf16.mxu0 0
          %766 = vmatpush1.bf16.xpose.msra.mxu0 0
          %767 = vmatprep.subr.bf16.mxu0 0
          %768 = vmatpush1.bf16.xpose.msra.mxu0 0
          %769 = vmatprep.subr.bf16.mxu0 0
          %770 = vmatpush1.bf16.xpose.msra.mxu0 0
          %771 = vmatprep.subr.bf16.mxu0 0
          %772 = vmatpush1.bf16.xpose.msra.mxu0 0
          %773 = vmatprep.subr.bf16.mxu0 0
          %774 = vmatpush1.bf16.xpose.msra.mxu0 0
          %775 = vmatprep.subr.bf16.mxu0 0
          %776 = vmatpush1.bf16.xpose.msra.mxu0 0
          %777 = vmatprep.subr.bf16.mxu0 0
          %778 = vmatpush1.bf16.xpose.msra.mxu0 0
          %779 = vmatprep.subr.bf16.mxu0 0
          %780 = vmatpush1.bf16.xpose.msra.mxu0 0
          %781 = vmatprep.subr.bf16.mxu0 0
          %782 = vmatpush1.bf16.xpose.msra.mxu0 0
          %783 = vmatprep.subr.bf16.mxu0 0
          %784 = vmatpush1.bf16.xpose.msra.mxu0 0
          %785 = vmatprep.subr.bf16.mxu0 0
          %786 = vmatpush1.bf16.xpose.msra.mxu0 0
          %787 = vmatprep.subr.bf16.mxu0 0
          %788 = vmatpush1.bf16.xpose.msra.mxu0 0
          %789 = vmatprep.subr.bf16.mxu0 0
          %790 = vmatpush1.bf16.xpose.msra.mxu0 0
          %791 = vmatprep.subr.bf16.mxu0 0
          %792 = vmatpush1.bf16.xpose.msra.mxu0 0
          %793 = vmatprep.mubr.bf16.mxu0 0
          %794 = vmatmul.mubr.bf16.gmra.mrb[0].mxu0 %v756
          %v795 = vpop.f32.mrb[0].mxu0
          %v796 = vadd.f32 0.0, %v795
          %v797 = vpop.f32.mrb[0].mxu0
          %v798 = vpop.f32.mrb[0].mxu0
          %v799 = vpop.f32.mrb[0].mxu0
          %800 = vdwg.mxu0
          %v802 = vsel %vm662, %v621, 0
          %v805 = vsel %vm662, %v655, 0
          %807 = vmatprep.subr.bf16.mxu0 0
          %808 = vmatpush1.bf16.xpose.msra.mxu0 %v805
          %809 = vmatprep.subr.bf16.mxu0 0
          %810 = vmatpush1.bf16.xpose.msra.mxu0 0
          %811 = vmatprep.subr.bf16.mxu0 0
          %812 = vmatpush1.bf16.xpose.msra.mxu0 0
          %813 = vmatprep.subr.bf16.mxu0 0
          %814 = vmatpush1.bf16.xpose.msra.mxu0 0
          %815 = vmatprep.subr.bf16.mxu0 0
          %816 = vmatpush1.bf16.xpose.msra.mxu0 0
          %817 = vmatprep.subr.bf16.mxu0 0
          %818 = vmatpush1.bf16.xpose.msra.mxu0 0
          %819 = vmatprep.subr.bf16.mxu0 0
          %820 = vmatpush1.bf16.xpose.msra.mxu0 0
          %821 = vmatprep.subr.bf16.mxu0 0
          %822 = vmatpush1.bf16.xpose.msra.mxu0 0
          %823 = vmatprep.subr.bf16.mxu0 0
          %824 = vmatpush1.bf16.xpose.msra.mxu0 0
          %825 = vmatprep.subr.bf16.mxu0 0
          %826 = vmatpush1.bf16.xpose.msra.mxu0 0
          %827 = vmatprep.subr.bf16.mxu0 0
          %828 = vmatpush1.bf16.xpose.msra.mxu0 0
          %829 = vmatprep.subr.bf16.mxu0 0
          %830 = vmatpush1.bf16.xpose.msra.mxu0 0
          %831 = vmatprep.subr.bf16.mxu0 0
          %832 = vmatpush1.bf16.xpose.msra.mxu0 0
          %833 = vmatprep.subr.bf16.mxu0 0
          %834 = vmatpush1.bf16.xpose.msra.mxu0 0
          %835 = vmatprep.subr.bf16.mxu0 0
          %836 = vmatpush1.bf16.xpose.msra.mxu0 0
          %837 = vmatprep.subr.bf16.mxu0 0
          %838 = vmatpush1.bf16.xpose.msra.mxu0 0
          %839 = vmatprep.mubr.bf16.mxu0 0
          %840 = vmatmul.mubr.bf16.gmra.mrb[0].mxu0 %v802
          %v841 = vpop.f32.mrb[0].mxu0
          %v842 = vadd.f32 0.0, %v841
          %v843 = vpop.f32.mrb[0].mxu0
          %v844 = vpop.f32.mrb[0].mxu0
          %v845 = vpop.f32.mrb[0].mxu0
          %846 = vdwg.mxu0
          %v847 = vstv %s647
          %v848 = vadd.s32 %v847, %v627
          %vm849 = vcmp.ge.s32.totalorder %v625, %v848
          %v850 = vsel %vm849, 1, 0
          %vm851 = vcmp.eq.s32.totalorder %v850, 1
          %v852 = vsel %vm851, %v704, -1e+30
          %v853 = vsel %vm851, %v750, -1e+30
          %v854 = vsel %vm851, %v796, -1e+30
          %v855 = vsel %vm851, %v842, -1e+30
          %v856 = vsel %vm662, %v852, -inf
          %857 = vmax.xlane.f32.xlu0 %v856
          %v858 = vpop.xlane.xlu0 %857
          %v859 = vsel %vm662, %v853, -inf
          %860 = vmax.xlane.f32.xlu0 %v859
          %v861 = vpop.xlane.xlu0 %860
          %v862 = vsel %vm662, %v854, -inf
          %863 = vmax.xlane.f32.xlu0 %v862
          %v864 = vpop.xlane.xlu0 %863
          %v865 = vsel %vm662, %v855, -inf
          %866 = vmax.xlane.f32.xlu0 %v865
          %v867 = vpop.xlane.xlu0 %866
          %v868 = vmax.f32 %v635, %v858
          %v869 = vmax.f32 %v636, %v861
          %v870 = vmax.f32 %v637, %v864
          %v871 = vmax.f32 %v638, %v867
          %v872 = vsub.f32 %v635, %v868
          %v873 = vsub.f32 %v636, %v869
          %v874 = vsub.f32 %v637, %v870
          %v875 = vsub.f32 %v638, %v871
          %v876 = vmul.f32 %v872, 1.442695
          %v877 = vpow.pop %v876
          %v878 = vmul.f32 %v873, 1.442695
          %v879 = vpow.pop %v878
          %v880 = vmul.f32 %v874, 1.442695
          %v881 = vpow.pop %v880
          %v882 = vmul.f32 %v875, 1.442695
          %v883 = vpow.pop %v882
          %v884 = vsub.f32 %v852, %v868
          %v885 = vsub.f32 %v853, %v869
          %v886 = vsub.f32 %v854, %v870
          %v887 = vsub.f32 %v855, %v871
          %v888 = vmul.f32 %v884, 1.442695
          %v889 = vpow.pop %v888
          %v890 = vmul.f32 %v885, 1.442695
          %v891 = vpow.pop %v890
          %v892 = vmul.f32 %v886, 1.442695
          %v893 = vpow.pop %v892
          %v894 = vmul.f32 %v887, 1.442695
          %v895 = vpow.pop %v894
          %v896 = vmul.f32 %v877, %v639
          %v897 = vmul.f32 %v879, %v640
          %v898 = vmul.f32 %v881, %v641
          %v899 = vmul.f32 %v883, %v642
          %v900 = vsel %vm662, %v889, 0.0
          %901 = vadd.xlane.f32.xlu0 %v900
          %v902 = vpop.xlane.xlu0 %901
          %v903 = vsel %vm662, %v891, 0.0
          %904 = vadd.xlane.f32.xlu0 %v903
          %v905 = vpop.xlane.xlu0 %904
          %v906 = vsel %vm662, %v893, 0.0
          %907 = vadd.xlane.f32.xlu0 %v906
          %v908 = vpop.xlane.xlu0 %907
          %v909 = vsel %vm662, %v895, 0.0
          %910 = vadd.xlane.f32.xlu0 %v909
          %v911 = vpop.xlane.xlu0 %910
          %v912 = vadd.f32 %v896, %v902
          %v913 = vadd.f32 %v897, %v905
          %v914 = vadd.f32 %v898, %v908
          %v915 = vadd.f32 %v899, %v911
          %v916 = vmul.f32 %v877, %v643
          %v917 = vmul.f32 %v879, %v644
          %v918 = vmul.f32 %v881, %v645
          %v919 = vmul.f32 %v883, %v646
          %v920 = vpack.c.bf16 %v889, %v889
          %v921 = vpack.c.bf16 %v891, %v891
          %v922 = vpack.c.bf16 %v893, %v893
          %v923 = vpack.c.bf16 %v895, %v895
          %v925 = vsel %vm662, %v920, 0
          %vm927 = vcmask 1043456
          %v929 = vsel %vm927, %v658, 0
          %931 = vmatprep.subr.bf16.mxu0 0
          %932 = vmatpush1.bf16.msra.mxu0 %v929
          %933 = vmatprep.subr.bf16.mxu0 0
          %934 = vmatpush1.bf16.msra.mxu0 0
          %935 = vmatprep.subr.bf16.mxu0 0
          %936 = vmatpush1.bf16.msra.mxu0 0
          %937 = vmatprep.subr.bf16.mxu0 0
          %938 = vmatpush1.bf16.msra.mxu0 0
          %939 = vmatprep.subr.bf16.mxu0 0
          %940 = vmatpush1.bf16.msra.mxu0 0
          %941 = vmatprep.subr.bf16.mxu0 0
          %942 = vmatpush1.bf16.msra.mxu0 0
          %943 = vmatprep.subr.bf16.mxu0 0
          %944 = vmatpush1.bf16.msra.mxu0 0
          %945 = vmatprep.subr.bf16.mxu0 0
          %946 = vmatpush1.bf16.msra.mxu0 0
          %947 = vmatprep.subr.bf16.mxu0 0
          %948 = vmatpush1.bf16.msra.mxu0 0
          %949 = vmatprep.subr.bf16.mxu0 0
          %950 = vmatpush1.bf16.msra.mxu0 0
          %951 = vmatprep.subr.bf16.mxu0 0
          %952 = vmatpush1.bf16.msra.mxu0 0
          %953 = vmatprep.subr.bf16.mxu0 0
          %954 = vmatpush1.bf16.msra.mxu0 0
          %955 = vmatprep.subr.bf16.mxu0 0
          %956 = vmatpush1.bf16.msra.mxu0 0
          %957 = vmatprep.subr.bf16.mxu0 0
          %958 = vmatpush1.bf16.msra.mxu0 0
          %959 = vmatprep.subr.bf16.mxu0 0
          %960 = vmatpush1.bf16.msra.mxu0 0
          %961 = vmatprep.subr.bf16.mxu0 0
          %962 = vmatpush1.bf16.msra.mxu0 0
          %963 = vmatprep.mubr.bf16.mxu0 0
          %964 = vmatmul.mubr.bf16.gmra.mrb[0].mxu0 %v925
          %v965 = vpop.f32.mrb[0].mxu0
          %v966 = vadd.f32 0.0, %v965
          %v967 = vpop.f32.mrb[0].mxu0
          %v968 = vpop.f32.mrb[0].mxu0
          %v969 = vpop.f32.mrb[0].mxu0
          %970 = vdwg.mxu0
          %v972 = vsel %vm662, %v921, 0
          %v975 = vsel %vm927, %v659, 0
          %977 = vmatprep.subr.bf16.mxu0 0
          %978 = vmatpush1.bf16.msra.mxu0 %v975
          %979 = vmatprep.subr.bf16.mxu0 0
          %980 = vmatpush1.bf16.msra.mxu0 0
          %981 = vmatprep.subr.bf16.mxu0 0
          %982 = vmatpush1.bf16.msra.mxu0 0
          %983 = vmatprep.subr.bf16.mxu0 0
          %984 = vmatpush1.bf16.msra.mxu0 0
          %985 = vmatprep.subr.bf16.mxu0 0
          %986 = vmatpush1.bf16.msra.mxu0 0
          %987 = vmatprep.subr.bf16.mxu0 0
          %988 = vmatpush1.bf16.msra.mxu0 0
          %989 = vmatprep.subr.bf16.mxu0 0
          %990 = vmatpush1.bf16.msra.mxu0 0
          %991 = vmatprep.subr.bf16.mxu0 0
          %992 = vmatpush1.bf16.msra.mxu0 0
          %993 = vmatprep.subr.bf16.mxu0 0
          %994 = vmatpush1.bf16.msra.mxu0 0
          %995 = vmatprep.subr.bf16.mxu0 0
          %996 = vmatpush1.bf16.msra.mxu0 0
          %997 = vmatprep.subr.bf16.mxu0 0
          %998 = vmatpush1.bf16.msra.mxu0 0
          %999 = vmatprep.subr.bf16.mxu0 0
          %1000 = vmatpush1.bf16.msra.mxu0 0
          %1001 = vmatprep.subr.bf16.mxu0 0
          %1002 = vmatpush1.bf16.msra.mxu0 0
          %1003 = vmatprep.subr.bf16.mxu0 0
          %1004 = vmatpush1.bf16.msra.mxu0 0
          %1005 = vmatprep.subr.bf16.mxu0 0
          %1006 = vmatpush1.bf16.msra.mxu0 0
          %1007 = vmatprep.subr.bf16.mxu0 0
          %1008 = vmatpush1.bf16.msra.mxu0 0
          %1009 = vmatprep.mubr.bf16.mxu0 0
          %1010 = vmatmul.mubr.bf16.gmra.mrb[0].mxu0 %v972
          %v1011 = vpop.f32.mrb[0].mxu0
          %v1012 = vadd.f32 0.0, %v1011
          %v1013 = vpop.f32.mrb[0].mxu0
          %v1014 = vpop.f32.mrb[0].mxu0
          %v1015 = vpop.f32.mrb[0].mxu0
          %1016 = vdwg.mxu0
          %v1018 = vsel %vm662, %v922, 0
          %v1021 = vsel %vm927, %v660, 0
          %1023 = vmatprep.subr.bf16.mxu0 0
          %1024 = vmatpush1.bf16.msra.mxu0 %v1021
          %1025 = vmatprep.subr.bf16.mxu0 0
          %1026 = vmatpush1.bf16.msra.mxu0 0
          %1027 = vmatprep.subr.bf16.mxu0 0
          %1028 = vmatpush1.bf16.msra.mxu0 0
          %1029 = vmatprep.subr.bf16.mxu0 0
          %1030 = vmatpush1.bf16.msra.mxu0 0
          %1031 = vmatprep.subr.bf16.mxu0 0
          %1032 = vmatpush1.bf16.msra.mxu0 0
          %1033 = vmatprep.subr.bf16.mxu0 0
          %1034 = vmatpush1.bf16.msra.mxu0 0
          %1035 = vmatprep.subr.bf16.mxu0 0
          %1036 = vmatpush1.bf16.msra.mxu0 0
          %1037 = vmatprep.subr.bf16.mxu0 0
          %1038 = vmatpush1.bf16.msra.mxu0 0
          %1039 = vmatprep.subr.bf16.mxu0 0
          %1040 = vmatpush1.bf16.msra.mxu0 0
          %1041 = vmatprep.subr.bf16.mxu0 0
          %1042 = vmatpush1.bf16.msra.mxu0 0
          %1043 = vmatprep.subr.bf16.mxu0 0
          %1044 = vmatpush1.bf16.msra.mxu0 0
          %1045 = vmatprep.subr.bf16.mxu0 0
          %1046 = vmatpush1.bf16.msra.mxu0 0
          %1047 = vmatprep.subr.bf16.mxu0 0
          %1048 = vmatpush1.bf16.msra.mxu0 0
          %1049 = vmatprep.subr.bf16.mxu0 0
          %1050 = vmatpush1.bf16.msra.mxu0 0
          %1051 = vmatprep.subr.bf16.mxu0 0
          %1052 = vmatpush1.bf16.msra.mxu0 0
          %1053 = vmatprep.subr.bf16.mxu0 0
          %1054 = vmatpush1.bf16.msra.mxu0 0
          %1055 = vmatprep.mubr.bf16.mxu0 0
          %1056 = vmatmul.mubr.bf16.gmra.mrb[0].mxu0 %v1018
          %v1057 = vpop.f32.mrb[0].mxu0
          %v1058 = vadd.f32 0.0, %v1057
          %v1059 = vpop.f32.mrb[0].mxu0
          %v1060 = vpop.f32.mrb[0].mxu0
          %v1061 = vpop.f32.mrb[0].mxu0
          %1062 = vdwg.mxu0
          %v1064 = vsel %vm662, %v923, 0
          %v1067 = vsel %vm927, %v661, 0
          %1069 = vmatprep.subr.bf16.mxu0 0
          %1070 = vmatpush1.bf16.msra.mxu0 %v1067
          %1071 = vmatprep.subr.bf16.mxu0 0
          %1072 = vmatpush1.bf16.msra.mxu0 0
          %1073 = vmatprep.subr.bf16.mxu0 0
          %1074 = vmatpush1.bf16.msra.mxu0 0
          %1075 = vmatprep.subr.bf16.mxu0 0
          %1076 = vmatpush1.bf16.msra.mxu0 0
          %1077 = vmatprep.subr.bf16.mxu0 0
          %1078 = vmatpush1.bf16.msra.mxu0 0
          %1079 = vmatprep.subr.bf16.mxu0 0
          %1080 = vmatpush1.bf16.msra.mxu0 0
          %1081 = vmatprep.subr.bf16.mxu0 0
          %1082 = vmatpush1.bf16.msra.mxu0 0
          %1083 = vmatprep.subr.bf16.mxu0 0
          %1084 = vmatpush1.bf16.msra.mxu0 0
          %1085 = vmatprep.subr.bf16.mxu0 0
          %1086 = vmatpush1.bf16.msra.mxu0 0
          %1087 = vmatprep.subr.bf16.mxu0 0
          %1088 = vmatpush1.bf16.msra.mxu0 0
          %1089 = vmatprep.subr.bf16.mxu0 0
          %1090 = vmatpush1.bf16.msra.mxu0 0
          %1091 = vmatprep.subr.bf16.mxu0 0
          %1092 = vmatpush1.bf16.msra.mxu0 0
          %1093 = vmatprep.subr.bf16.mxu0 0
          %1094 = vmatpush1.bf16.msra.mxu0 0
          %1095 = vmatprep.subr.bf16.mxu0 0
          %1096 = vmatpush1.bf16.msra.mxu0 0
          %1097 = vmatprep.subr.bf16.mxu0 0
          %1098 = vmatpush1.bf16.msra.mxu0 0
          %1099 = vmatprep.subr.bf16.mxu0 0
          %1100 = vmatpush1.bf16.msra.mxu0 0
          %1101 = vmatprep.mubr.bf16.mxu0 0
          %1102 = vmatmul.mubr.bf16.gmra.mrb[0].mxu0 %v1064
          %v1103 = vpop.f32.mrb[0].mxu0
          %v1104 = vadd.f32 0.0, %v1103
          %v1105 = vpop.f32.mrb[0].mxu0
          %v1106 = vpop.f32.mrb[0].mxu0
          %v1107 = vpop.f32.mrb[0].mxu0
          %1108 = vdwg.mxu0
          %v1109 = vadd.f32 %v916, %v966
          %v1110 = vadd.f32 %v917, %v1012
          %v1111 = vadd.f32 %v918, %v1058
          %v1112 = vadd.f32 %v919, %v1104
        $region81: #{tpu_custom_call.1} parent=71 // loop_footer
          %s632 = sadd.s32 %s630, 1
        $region82: #{tpu_custom_call.1} parent=71 // loop_footer_branch
          %629 = sbr.rel target = $region78
        $region83: #{tpu_custom_call.1} parent=71 // loop_exit
          _
        %v1113 = vrcp.pop %v639
        %v1114 = vrcp.pop %v640
        %v1115 = vrcp.pop %v641
        %v1116 = vrcp.pop %v642
        %v1117 = vmul.f32 %v643, %v1113
        %v1118 = vmul.f32 %v644, %v1114
        %v1119 = vmul.f32 %v645, %v1115
        %v1120 = vmul.f32 %v646, %v1116
        %v1121 = vpack.c.bf16 %v1117, %v1117
        %v1122 = vld [vmem:[%s5] sm:$0xf]
        %v1123 = vpack.c.bf16 %v1118, %v1118
        %s1124 = scalar_lea.vmem %s5, 4
        %v1125 = vld [vmem:[%s1124] sm:$0xf]
        %vm1126 = vcmask 64512
        %v1128 = vsel %vm1126, %v1123, 0
        %vm1130 = vcmask 1043456
        %v1132 = vsel %vm1130, %v1125, 0
        %1134 = vmatprep.subr.bf16.mxu0 0
        %1135 = vmatpush1.bf16.msra.mxu0 %v1132
        %1136 = vmatprep.subr.bf16.mxu0 0
        %1137 = vmatpush1.bf16.msra.mxu0 0
        %1138 = vmatprep.subr.bf16.mxu0 0
        %1139 = vmatpush1.bf16.msra.mxu0 0
        %1140 = vmatprep.subr.bf16.mxu0 0
        %1141 = vmatpush1.bf16.msra.mxu0 0
        %1142 = vmatprep.subr.bf16.mxu0 0
        %1143 = vmatpush1.bf16.msra.mxu0 0
        %1144 = vmatprep.subr.bf16.mxu0 0
        %1145 = vmatpush1.bf16.msra.mxu0 0
        %1146 = vmatprep.subr.bf16.mxu0 0
        %1147 = vmatpush1.bf16.msra.mxu0 0
        %1148 = vmatprep.subr.bf16.mxu0 0
        %1149 = vmatpush1.bf16.msra.mxu0 0
        %1150 = vmatprep.subr.bf16.mxu0 0
        %1151 = vmatpush1.bf16.msra.mxu0 0
        %1152 = vmatprep.subr.bf16.mxu0 0
        %1153 = vmatpush1.bf16.msra.mxu0 0
        %1154 = vmatprep.subr.bf16.mxu0 0
        %1155 = vmatpush1.bf16.msra.mxu0 0
        %1156 = vmatprep.subr.bf16.mxu0 0
        %1157 = vmatpush1.bf16.msra.mxu0 0
        %1158 = vmatprep.subr.bf16.mxu0 0
        %1159 = vmatpush1.bf16.msra.mxu0 0
        %1160 = vmatprep.subr.bf16.mxu0 0
        %1161 = vmatpush1.bf16.msra.mxu0 0
        %1162 = vmatprep.subr.bf16.mxu0 0
        %1163 = vmatpush1.bf16.msra.mxu0 0
        %1164 = vmatprep.subr.bf16.mxu0 0
        %1165 = vmatpush1.bf16.msra.mxu0 0
        %1166 = vmatprep.mubr.bf16.mxu0 0
        %1167 = vmatmul.mubr.bf16.gmra.mrb[0].mxu0 %v1128
        %v1168 = vpop.f32.mrb[0].mxu0
        %v1169 = vadd.f32 0.0, %v1168
        %v1170 = vpop.f32.mrb[0].mxu0
        %v1171 = vpop.f32.mrb[0].mxu0
        %v1172 = vpop.f32.mrb[0].mxu0
        %1173 = vdwg.mxu0
        %v1175 = vsel %vm1126, %v1121, 0
        %v1178 = vsel %vm1130, %v1122, 0
        %1180 = vmatprep.subr.bf16.mxu0 0
        %1181 = vmatpush1.bf16.msra.mxu0 %v1178
        %1182 = vmatprep.subr.bf16.mxu0 0
        %1183 = vmatpush1.bf16.msra.mxu0 0
        %1184 = vmatprep.subr.bf16.mxu0 0
        %1185 = vmatpush1.bf16.msra.mxu0 0
        %1186 = vmatprep.subr.bf16.mxu0 0
        %1187 = vmatpush1.bf16.msra.mxu0 0
        %1188 = vmatprep.subr.bf16.mxu0 0
        %1189 = vmatpush1.bf16.msra.mxu0 0
        %1190 = vmatprep.subr.bf16.mxu0 0
        %1191 = vmatpush1.bf16.msra.mxu0 0
        %1192 = vmatprep.subr.bf16.mxu0 0
        %1193 = vmatpush1.bf16.msra.mxu0 0
        %1194 = vmatprep.subr.bf16.mxu0 0
        %1195 = vmatpush1.bf16.msra.mxu0 0
        %1196 = vmatprep.subr.bf16.mxu0 0
        %1197 = vmatpush1.bf16.msra.mxu0 0
        %1198 = vmatprep.subr.bf16.mxu0 0
        %1199 = vmatpush1.bf16.msra.mxu0 0
        %1200 = vmatprep.subr.bf16.mxu0 0
        %1201 = vmatpush1.bf16.msra.mxu0 0
        %1202 = vmatprep.subr.bf16.mxu0 0
        %1203 = vmatpush1.bf16.msra.mxu0 0
        %1204 = vmatprep.subr.bf16.mxu0 0
        %1205 = vmatpush1.bf16.msra.mxu0 0
        %1206 = vmatprep.subr.bf16.mxu0 0
        %1207 = vmatpush1.bf16.msra.mxu0 0
        %1208 = vmatprep.subr.bf16.mxu0 0
        %1209 = vmatpush1.bf16.msra.mxu0 0
        %1210 = vmatprep.subr.bf16.mxu0 0
        %1211 = vmatpush1.bf16.msra.mxu0 0
        %1212 = vmatprep.mubr.bf16.mxu0 0
        %1213 = vmatmul.mubr.bf16.gmra.mrb[0].mxu0 %v1175
        %v1214 = vpop.f32.mrb[0].mxu0
        %v1215 = vadd.f32 %v1169, %v1214
        %v1216 = vpop.f32.mrb[0].mxu0
        %v1217 = vpop.f32.mrb[0].mxu0
        %v1218 = vpop.f32.mrb[0].mxu0
        %1219 = vdwg.mxu0
        %v1220 = vpack.c.bf16 %v1119, %v1119
        %s1221 = scalar_lea.vmem %s5, 8
        %v1222 = vld [vmem:[%s1221] sm:$0xf]
        %v1224 = vsel %vm1126, %v1220, 0
        %v1227 = vsel %vm1130, %v1222, 0
        %1229 = vmatprep.subr.bf16.mxu0 0
        %1230 = vmatpush1.bf16.msra.mxu0 %v1227
        %1231 = vmatprep.subr.bf16.mxu0 0
        %1232 = vmatpush1.bf16.msra.mxu0 0
        %1233 = vmatprep.subr.bf16.mxu0 0
        %1234 = vmatpush1.bf16.msra.mxu0 0
        %1235 = vmatprep.subr.bf16.mxu0 0
        %1236 = vmatpush1.bf16.msra.mxu0 0
        %1237 = vmatprep.subr.bf16.mxu0 0
        %1238 = vmatpush1.bf16.msra.mxu0 0
        %1239 = vmatprep.subr.bf16.mxu0 0
        %1240 = vmatpush1.bf16.msra.mxu0 0
        %1241 = vmatprep.subr.bf16.mxu0 0
        %1242 = vmatpush1.bf16.msra.mxu0 0
        %1243 = vmatprep.subr.bf16.mxu0 0
        %1244 = vmatpush1.bf16.msra.mxu0 0
        %1245 = vmatprep.subr.bf16.mxu0 0
        %1246 = vmatpush1.bf16.msra.mxu0 0
        %1247 = vmatprep.subr.bf16.mxu0 0
        %1248 = vmatpush1.bf16.msra.mxu0 0
        %1249 = vmatprep.subr.bf16.mxu0 0
        %1250 = vmatpush1.bf16.msra.mxu0 0
        %1251 = vmatprep.subr.bf16.mxu0 0
        %1252 = vmatpush1.bf16.msra.mxu0 0
        %1253 = vmatprep.subr.bf16.mxu0 0
        %1254 = vmatpush1.bf16.msra.mxu0 0
        %1255 = vmatprep.subr.bf16.mxu0 0
        %1256 = vmatpush1.bf16.msra.mxu0 0
        %1257 = vmatprep.subr.bf16.mxu0 0
        %1258 = vmatpush1.bf16.msra.mxu0 0
        %1259 = vmatprep.subr.bf16.mxu0 0
        %1260 = vmatpush1.bf16.msra.mxu0 0
        %1261 = vmatprep.mubr.bf16.mxu0 0
        %1262 = vmatmul.mubr.bf16.gmra.mrb[0].mxu0 %v1224
        %v1263 = vpop.f32.mrb[0].mxu0
        %v1264 = vadd.f32 0.0, %v1263
        %v1265 = vpop.f32.mrb[0].mxu0
        %v1266 = vpop.f32.mrb[0].mxu0
        %v1267 = vpop.f32.mrb[0].mxu0
        %1268 = vdwg.mxu0
        %v1269 = vadd.f32 %v1215, %v1264
        %v1270 = vpack.c.bf16 %v1120, %v1120
        %s1271 = scalar_lea.vmem %s5, 12
        %v1272 = vld [vmem:[%s1271] sm:$0xf]
        %v1274 = vsel %vm1126, %v1270, 0
        %v1277 = vsel %vm1130, %v1272, 0
        %1279 = vmatprep.subr.bf16.mxu0 0
        %1280 = vmatpush1.bf16.msra.mxu0 %v1277
        %1281 = vmatprep.subr.bf16.mxu0 0
        %1282 = vmatpush1.bf16.msra.mxu0 0
        %1283 = vmatprep.subr.bf16.mxu0 0
        %1284 = vmatpush1.bf16.msra.mxu0 0
        %1285 = vmatprep.subr.bf16.mxu0 0
        %1286 = vmatpush1.bf16.msra.mxu0 0
        %1287 = vmatprep.subr.bf16.mxu0 0
        %1288 = vmatpush1.bf16.msra.mxu0 0
        %1289 = vmatprep.subr.bf16.mxu0 0
        %1290 = vmatpush1.bf16.msra.mxu0 0
        %1291 = vmatprep.subr.bf16.mxu0 0
        %1292 = vmatpush1.bf16.msra.mxu0 0
        %1293 = vmatprep.subr.bf16.mxu0 0
        %1294 = vmatpush1.bf16.msra.mxu0 0
        %1295 = vmatprep.subr.bf16.mxu0 0
        %1296 = vmatpush1.bf16.msra.mxu0 0
        %1297 = vmatprep.subr.bf16.mxu0 0
        %1298 = vmatpush1.bf16.msra.mxu0 0
        %1299 = vmatprep.subr.bf16.mxu0 0
        %1300 = vmatpush1.bf16.msra.mxu0 0
        %1301 = vmatprep.subr.bf16.mxu0 0
        %1302 = vmatpush1.bf16.msra.mxu0 0
        %1303 = vmatprep.subr.bf16.mxu0 0
        %1304 = vmatpush1.bf16.msra.mxu0 0
        %1305 = vmatprep.subr.bf16.mxu0 0
        %1306 = vmatpush1.bf16.msra.mxu0 0
        %1307 = vmatprep.subr.bf16.mxu0 0
        %1308 = vmatpush1.bf16.msra.mxu0 0
        %1309 = vmatprep.subr.bf16.mxu0 0
        %1310 = vmatpush1.bf16.msra.mxu0 0
        %1311 = vmatprep.mubr.bf16.mxu0 0
        %1312 = vmatmul.mubr.bf16.gmra.mrb[0].mxu0 %v1274
        %v1313 = vpop.f32.mrb[0].mxu0
        %v1314 = vadd.f32 0.0, %v1313
        %v1315 = vpop.f32.mrb[0].mxu0
        %v1316 = vpop.f32.mrb[0].mxu0
        %v1317 = vpop.f32.mrb[0].mxu0
        %1318 = vdwg.mxu0
        %v1319 = vadd.f32 %v1269, %v1314
        %v1320 = vld [vmem:[%s6] sm:$0x1]
        %v1322 = vlaneseq
        %v1323 = vshrl.u32 %v1322, 7
        %v1324 = vsub.s32 0, %v1323
        %v1325 = vrot.slane %v1320, %v1324
        %v1327 = vadd.f32 %v1319, %v1325
        %s1328 = scalar_lea.vmem %s449, %s451
        %v1329 = vld [vmem:[%s1328] sm:$0xff]
        %v1330 = vadd.f32 %v1329, %v1327
        %v1331 = vld [vmem:[%s7] sm:$0x1]
        %v1332 = vld [vmem:[%s8] sm:$0x1]
        %vm1333 = vcmask 261120
        %v1334 = vsel %vm1333, %v1330, 0.0
        %1335 = vadd.xlane.f32.xlu0 %v1334
        %v1336 = vpop.xlane.xlu0 %1335
        %v1337 = vrcp.pop 32.0
        %v1338 = vmul.f32 %v1336, %v1337
        %v1339 = vsub.f32 %v1330, %v1338
        %v1340 = vmul.f32 %v1339, %v1339
        %v1341 = vsel %vm1333, %v1340, 0.0
        %1342 = vadd.xlane.f32.xlu0 %v1341
        %v1343 = vpop.xlane.xlu0 %1342
        %v1344 = vmul.f32 %v1343, %v1337
        %v1345 = vadd.f32 %v1344, 1e-05
        %v1346 = vrsqrt.pop %v1345
        %v1347 = vmul.f32 %v1339, %v1346
        %v1349 = vlaneseq
        %v1350 = vshrl.u32 %v1349, 7
        %v1351 = vsub.s32 0, %v1350
        %v1352 = vrot.slane %v1331, %v1351
        %v1354 = vmul.f32 %v1347, %v1352
        %v1356 = vlaneseq
        %v1357 = vshrl.u32 %v1356, 7
        %v1358 = vsub.s32 0, %v1357
        %v1359 = vrot.slane %v1332, %v1358
        %v1361 = vadd.f32 %v1354, %v1359
        %v1362 = vpack.c.bf16 %v1361, %v1361
        %v1363 = vld [vmem:[%s9] sm:$0xf]
        %v1364 = vld [vmem:[%s9 + $0x4] sm:$0xf]
        %v1365 = vld [vmem:[%s9 + $0x8] sm:$0xf]
        %v1366 = vld [vmem:[%s9 + $0xc] sm:$0xf]
        %v1367 = vld [vmem:[%s10] sm:$0x1]
        %v1369 = vlaneseq
        %v1370 = vshrl.u32 %v1369, 7
        %v1371 = vsub.s32 0, %v1370
        %v1372 = vrot.slane %v1367, %v1371
        %v1378 = vunpack.c.l.b16 %v1363
        %v1379 = vunpack.c.l.b16 %v1364
        %v1380 = vunpack.c.l.b16 %v1365
        %v1381 = vunpack.c.l.b16 %v1366
        %v1382 = vpack.c.b16 %v1379, %v1378
        %v1383 = vpack.c.b16 %v1381, %v1380
        %v1387 = vsel %vm1333, %v1362, 0
        %1389 = vmatprep.subr.bf16.mxu0 0
        %1390 = vmatpush1.bf16.msra.mxu0 %v1382
        %1391 = vmatprep.subr.bf16.mxu0 0
        %1392 = vmatpush1.bf16.msra.mxu0 %v1383
        %1393 = vmatprep.subr.bf16.mxu0 0
        %1394 = vmatpush1.bf16.msra.mxu0 0
        %1395 = vmatprep.subr.bf16.mxu0 0
        %1396 = vmatpush1.bf16.msra.mxu0 0
        %1397 = vmatprep.subr.bf16.mxu0 0
        %1398 = vmatpush1.bf16.msra.mxu0 0
        %1399 = vmatprep.subr.bf16.mxu0 0
        %1400 = vmatpush1.bf16.msra.mxu0 0
        %1401 = vmatprep.subr.bf16.mxu0 0
        %1402 = vmatpush1.bf16.msra.mxu0 0
        %1403 = vmatprep.subr.bf16.mxu0 0
        %1404 = vmatpush1.bf16.msra.mxu0 0
        %1405 = vmatprep.subr.bf16.mxu0 0
        %1406 = vmatpush1.bf16.msra.mxu0 0
        %1407 = vmatprep.subr.bf16.mxu0 0
        %1408 = vmatpush1.bf16.msra.mxu0 0
        %1409 = vmatprep.subr.bf16.mxu0 0
        %1410 = vmatpush1.bf16.msra.mxu0 0
        %1411 = vmatprep.subr.bf16.mxu0 0
        %1412 = vmatpush1.bf16.msra.mxu0 0
        %1413 = vmatprep.subr.bf16.mxu0 0
        %1414 = vmatpush1.bf16.msra.mxu0 0
        %1415 = vmatprep.subr.bf16.mxu0 0
        %1416 = vmatpush1.bf16.msra.mxu0 0
        %1417 = vmatprep.subr.bf16.mxu0 0
        %1418 = vmatpush1.bf16.msra.mxu0 0
        %1419 = vmatprep.subr.bf16.mxu0 0
        %1420 = vmatpush1.bf16.msra.mxu0 0
        %1421 = vmatprep.mubr.bf16.mxu0 0
        %1422 = vmatmul.mubr.bf16.gmra.mrb[0].mxu0 %v1387
        %v1423 = vpop.f32.mrb[0].mxu0
        %v1424 = vadd.f32 %v1372, %v1423
        %v1425 = vpop.f32.mrb[0].mxu0
        %v1426 = vpop.f32.mrb[0].mxu0
        %v1427 = vpop.f32.mrb[0].mxu0
        %1428 = vdwg.mxu0
        %v1429 = vmul.f32 %v1424, 0.5
        %v1430 = vmul.f32 %v1424, %v1424
        %v1431 = vmul.f32 %v1424, %v1430
        %v1432 = vmul.f32 %v1431, 0.044715
        %v1433 = vadd.f32 %v1424, %v1432
        %v1434 = vmul.f32 %v1433, 0.7978846
        %v1435 = vtanh.pop %v1434
        %v1436 = vadd.f32 %v1435, 1.0
        %v1437 = vmul.f32 %v1429, %v1436
        %v1438 = vpack.c.bf16 %v1437, %v1437
        %v1439 = vld [vmem:[%s11] sm:$0xf]
        %v1440 = vld [vmem:[%s11 + $0x4] sm:$0xf]
        %v1441 = vld [vmem:[%s11 + $0x8] sm:$0xf]
        %v1442 = vld [vmem:[%s11 + $0xc] sm:$0xf]
        %v1443 = vld [vmem:[%s11 + $0x10] sm:$0xf]
        %v1444 = vld [vmem:[%s11 + $0x14] sm:$0xf]
        %v1445 = vld [vmem:[%s11 + $0x18] sm:$0xf]
        %v1446 = vld [vmem:[%s11 + $0x1c] sm:$0xf]
        %v1447 = vld [vmem:[%s11 + $0x20] sm:$0xf]
        %v1448 = vld [vmem:[%s11 + $0x24] sm:$0xf]
        %v1449 = vld [vmem:[%s11 + $0x28] sm:$0xf]
        %v1450 = vld [vmem:[%s11 + $0x2c] sm:$0xf]
        %v1451 = vld [vmem:[%s11 + $0x30] sm:$0xf]
        %v1452 = vld [vmem:[%s11 + $0x34] sm:$0xf]
        %v1453 = vld [vmem:[%s11 + $0x38] sm:$0xf]
        %v1454 = vld [vmem:[%s11 + $0x3c] sm:$0xf]
        %v1455 = vld [vmem:[%s12] sm:$0x1]
        %v1457 = vlaneseq
        %v1458 = vshrl.u32 %v1457, 7
        %v1459 = vsub.s32 0, %v1458
        %v1460 = vrot.slane %v1455, %v1459
        %v1478 = vunpack.c.l.b16 %v1439
        %v1479 = vunpack.c.l.b16 %v1440
        %v1480 = vunpack.c.l.b16 %v1441
        %v1481 = vunpack.c.l.b16 %v1442
        %v1482 = vunpack.c.l.b16 %v1443
        %v1483 = vunpack.c.l.b16 %v1444
        %v1484 = vunpack.c.l.b16 %v1445
        %v1485 = vunpack.c.l.b16 %v1446
        %v1486 = vunpack.c.l.b16 %v1447
        %v1487 = vunpack.c.l.b16 %v1448
        %v1488 = vunpack.c.l.b16 %v1449
        %v1489 = vunpack.c.l.b16 %v1450
        %v1490 = vunpack.c.l.b16 %v1451
        %v1491 = vunpack.c.l.b16 %v1452
        %v1492 = vunpack.c.l.b16 %v1453
        %v1493 = vunpack.c.l.b16 %v1454
        %v1494 = vpack.c.b16 %v1479, %v1478
        %v1495 = vpack.c.b16 %v1481, %v1480
        %v1496 = vpack.c.b16 %v1483, %v1482
        %v1497 = vpack.c.b16 %v1485, %v1484
        %v1498 = vpack.c.b16 %v1487, %v1486
        %v1499 = vpack.c.b16 %v1489, %v1488
        %v1500 = vpack.c.b16 %v1491, %v1490
        %v1501 = vpack.c.b16 %v1493, %v1492
        %1510 = vmatprep.subr.bf16.mxu0 0
        %1511 = vmatpush1.bf16.msra.mxu0 %v1494
        %1512 = vmatprep.subr.bf16.mxu0 0
        %1513 = vmatpush1.bf16.msra.mxu0 %v1495
        %1514 = vmatprep.subr.bf16.mxu0 0
        %1515 = vmatpush1.bf16.msra.mxu0 %v1496
        %1516 = vmatprep.subr.bf16.mxu0 0
        %1517 = vmatpush1.bf16.msra.mxu0 %v1497
        %1518 = vmatprep.subr.bf16.mxu0 0
        %1519 = vmatpush1.bf16.msra.mxu0 %v1498
        %1520 = vmatprep.subr.bf16.mxu0 0
        %1521 = vmatpush1.bf16.msra.mxu0 %v1499
        %1522 = vmatprep.subr.bf16.mxu0 0
        %1523 = vmatpush1.bf16.msra.mxu0 %v1500
        %1524 = vmatprep.subr.bf16.mxu0 0
        %1525 = vmatpush1.bf16.msra.mxu0 %v1501
        %1526 = vmatprep.subr.bf16.mxu0 0
        %1527 = vmatpush1.bf16.msra.mxu0 0
        %1528 = vmatprep.subr.bf16.mxu0 0
        %1529 = vmatpush1.bf16.msra.mxu0 0
        %1530 = vmatprep.subr.bf16.mxu0 0
        %1531 = vmatpush1.bf16.msra.mxu0 0
        %1532 = vmatprep.subr.bf16.mxu0 0
        %1533 = vmatpush1.bf16.msra.mxu0 0
        %1534 = vmatprep.subr.bf16.mxu0 0
        %1535 = vmatpush1.bf16.msra.mxu0 0
        %1536 = vmatprep.subr.bf16.mxu0 0
        %1537 = vmatpush1.bf16.msra.mxu0 0
        %1538 = vmatprep.subr.bf16.mxu0 0
        %1539 = vmatpush1.bf16.msra.mxu0 0
        %1540 = vmatprep.subr.bf16.mxu0 0
        %1541 = vmatpush1.bf16.msra.mxu0 0
        %1542 = vmatprep.mubr.bf16.mxu0 0
        %1543 = vmatmul.mubr.bf16.gmra.mrb[0].mxu0 %v1438
        %v1544 = vpop.f32.mrb[0].mxu0
        %v1545 = vadd.f32 %v1460, %v1544
        %v1546 = vpop.f32.mrb[0].mxu0
        %v1547 = vpop.f32.mrb[0].mxu0
        %v1548 = vpop.f32.mrb[0].mxu0
        %1549 = vdwg.mxu0
        %v1550 = vadd.f32 %v1330, %v1545
        %1551 = vst.msk [vmem:[%s445] sm:$0xff] %vm1333, %v1550
        %s1552 = sand.u32 %s327, 1
        %s1553 = scalar_lea.sflag [#allocation6], %s1552
        %s1554 = sand.u32 %s327, 1
        %s1555 = smul.addr %s1554, 8
        %s1556 = scalar_lea.vmem [#allocation5], %s1555
        // Predicated region
        $region84: #{tpu_custom_call.1} parent=71 // pred_check
          %p1557 = pneg %p337
        $region85: #{tpu_custom_call.1} parent=71 // pred_check_branch
          %1559 = sbr.rel (%p1557) target = $region87
        $region86: #{tpu_custom_call.1} parent=71 // pred_region
          %s1561 = ssub.s32 128, 128
          %1562 = vsyncadd %s1553, %s1561
          %s1563 = sadd.s32 %s32, %s31
          %s1564 = smul.addr %s1563, 128
          %s1565 = scalar_lea.hbm %s13, %s1564
          %s1567 = sshll.u32 %s1556, 4
          %s1568 = int_to_ptr.vmem [resolvable:$true] %s1567
          %1570 = dma.vmem_to_hbm [thread:$0]  %s1568, 128, %s1565, %s1553
        $region87: #{tpu_custom_call.1} parent=71 // pred_fallthru
          _
      $region72: #{tpu_custom_call.1} parent=5 // pred_fallthru
        _
      %p1571 = scmp.le.s32.totalorder 2, %s22
      // Predicated region
      $region88: #{tpu_custom_call.1} parent=5 // pred_check
        %p1572 = pneg %p1571
      $region89: #{tpu_custom_call.1} parent=5 // pred_check_branch
        %1574 = sbr.rel (%p1572) target = $region91
      $region90: #{tpu_custom_call.1} parent=5 // pred_region
        %s1575 = ssub.s32 %s22, 2
        // Predicated region
        $region92: #{tpu_custom_call.1} parent=90 // pred_check
          %p1576 = pneg %p343
        $region93: #{tpu_custom_call.1} parent=90 // pred_check_branch
          %1578 = sbr.rel (%p1576) target = $region95
        $region94: #{tpu_custom_call.1} parent=90 // pred_region
          %s1579 = sand.u32 %s328, 1
          %s1580 = scalar_lea.sflag [#allocation6], %s1579
          %s1581 = sand.u32 %s328, 1
          %s1582 = smul.addr %s1581, 8
          %s1583 = scalar_lea.vmem [#allocation5], %s1582
          %1584 = dma.done %s1580, 128
        $region95: #{tpu_custom_call.1} parent=90 // pred_fallthru
          _
      $region91: #{tpu_custom_call.1} parent=5 // pred_fallthru
        _
    $region6: #{tpu_custom_call.1} parent=1 // loop_footer
      %s26 = sadd.s32 1, %s22
    $region7: #{tpu_custom_call.1} parent=1 // loop_footer_branch
      %21 = sbr.rel target = $region3
    $region8: #{tpu_custom_call.1} parent=1 // loop_exit
      _
    %1585 = vsyncpa [#allocation6], 1
    %s1586 = scalar_lea.sflag [#allocation6], 1
    %1587 = vsyncpa %s1586, 1

</llo_original>
